<compile_context>
chip_gen: v7x
topology: tpu7x:2x2x1
jax: 0.10.0
libtpu: 0.0.40
codegen_flags: <defaults>
</compile_context>

<pallas_src>
import numpy as np
import jax
import jax.numpy as jnp
from jax import lax
from jax.experimental import pallas as pl
from jax.experimental.pallas import tpu as pltpu

# ---------------- small configuration (consistent with the module) ----------------
B, S, D = 2, 8, 32          # batch, seq_len, model_dim
H = 4                       # num_heads
DH = D // H                 # head_dim
NS = 4                      # num_splats_per_head
HNS = H * NS
WINDOW = 4                  # trajectory_window
TRAJ_STRENGTH = 0.2
FFN = 4 * D
LN_EPS = 1e-5
BS = B * S                  # fused (batch*seq) rows
HBS = H * BS                # head-batched score width


# ---------------- in-kernel helpers ----------------
def _erf(x):
    # Abramowitz & Stegun 7.1.26, max abs error ~1.5e-7; exp -> EUP, reciprocal -> EUP (approx).
    a1, a2, a3, a4, a5 = 0.254829592, -0.284496736, 1.421413741, -1.453152027, 1.061405429
    p = 0.3275911
    sgn = jnp.where(x >= 0.0, 1.0, -1.0)
    ax = jnp.abs(x)
    t = pl.reciprocal(1.0 + p * ax, approx=True)
    poly = ((((a5 * t + a4) * t + a3) * t + a2) * t + a1) * t
    return sgn * (1.0 - poly * jnp.exp(-ax * ax))


def _gelu(x):
    # exact (erf-based) GELU, matching torch nn.GELU() default
    return 0.5 * x * (1.0 + _erf(x * (1.0 / np.sqrt(2.0))))


def _layernorm(h, g, b):
    mu = jnp.mean(h, axis=-1, keepdims=True)
    var = jnp.mean((h - mu) ** 2, axis=-1, keepdims=True)
    return (h - mu) * lax.rsqrt(var + LN_EPS) * g + b


# ---------------- the fused kernel (whole batch in one invocation) ----------------
def transformer_layer_kernel(x_ref, tc_ref, wqkv_ref, wout_ref, dr_ref, ac_ref,
                             w1_ref, w2_ref, pv_ref, gate_ref, out_ref):
    f32 = jnp.float32
    bf16 = jnp.bfloat16
    x = x_ref[...]                                                    # (BS, D) f32

    # packed small parameter vectors (one VMEM tile, static slices are free)
    pv = pv_ref[...]                                                  # (16, 128)
    c2, coef, amp = pv[0:1, :HNS], pv[1:2, :HNS], pv[2:3, :HNS]
    g1, be1 = pv[3:4, :D], pv[4:5, :D]
    bb2, g2, be2 = pv[5:6, :D], pv[6:7, :D], pv[7:8, :D]
    bb1 = pv[8:9, :FFN]
    gate = gate_ref[0, 0]                                             # sigmoid(trajectory_gate)

    # --- trajectory flows (kept f32: the gated flow dominates q/k at 0.02-scale weights) ---
    diff = tc_ref[0:BS, :]                                            # host-built next-minus-current
    dw = tc_ref[BS:2 * BS, :]                                         # block-diag distance-window mat
    # TODO(synk): tv could come from pltpu.roll(x, -1, axis=0) - x to drop this MXU push once the
    # sublane-roll shift direction is validated on-device; the host diff matrix is direction-exact
    # and has the batch-boundary rows zeroed outright (no garbage row ever enters the flows).
    tv = jnp.dot(diff, x, preferred_element_type=f32)                 # (BS, D): x[i+1]-x[i]
    mag = jnp.sqrt(jnp.sum(tv * tv, axis=-1, keepdims=True))          # (BS, 1)
    w = jnp.tanh(mag)
    cg = (gate * w) * pl.reciprocal(jnp.maximum(mag, 1e-8), approx=True)   # gate*w/|tv| per row
    trhs = jnp.concatenate([tv * cg, jnp.broadcast_to(w, (BS, D))], axis=-1)  # (BS, 2D)
    nd = jnp.dot(dw, trhs, preferred_element_type=f32)                # (BS, 2D): [gate*num | den]
    gflows = nd[:, :D] * pl.reciprocal(jnp.maximum(nd[:, D:], 1e-8), approx=True)

    # --- QKV projection (bias-free; bf16 operands, f32 accumulation) ---
    qkv = jnp.dot(x.astype(bf16), wqkv_ref[...], preferred_element_type=f32)   # (BS, 3D)
    q, k, v = qkv[:, :D], qkv[:, D:2 * D], qkv[:, 2 * D:]

    # --- splat weights for q & k stacked, all heads at once: ONE matmul via ||q||^2 - 2 q.c + ||c||^2
    qk = jnp.concatenate([q + gflows, k + gflows], axis=0)            # (2BS, D)
    dl = jnp.concatenate([qk * qk, qk], axis=-1)                      # (2BS, 2D)
    nc = jnp.dot(dl, dr_ref[...], preferred_element_type=f32)         # (2BS, 2HNS): [sum x^2 | x.c]
    dist = nc[:, :HNS] - 2.0 * nc[:, HNS:] + c2                       # (2BS, HNS), f32
    wts = amp * jnp.exp(coef * dist)                                  # (2BS, HNS), one exp for q & k
    qw, kw = wts[0:BS, :], wts[BS:2 * BS, :]

    # --- head-batched scores + softmax + value aggregation (2 lane-dense MXU pushes) ---
    bmask = ac_ref[0:BS, :]                                           # (BS, HBS) same-batch 0/1 mask
    vgm = ac_ref[BS:BS + HBS, :]                                      # (HBS, 2D) [feat mask|feat mask]
    smask = ac_ref[BS + HBS:BS + 2 * HBS, 0:HNS]                      # (HBS, HNS) per-head splat mask
    kwbd = jnp.concatenate([kw] * H, axis=0) * smask                  # (HBS, HNS) block-diag kw
    scores = lax.dot_general(qw, kwbd, (((1,), (1,)), ((), ())),
                             preferred_element_type=f32)              # (BS, HBS) all heads, lane-dense
    # scores in [0, NS]: qw,kw <= sigmoid(amplitude) <= 1 -> exp cannot overflow, no row-max needed;
    # multiplicative batch mask keeps cross-batch columns exactly zero in numerator AND denominator,
    # and every row keeps its S in-batch columns (exp >= 1) so the denominator is never zero.
    p = jnp.exp(scores) * bmask                                       # (BS, HBS)
    v4 = jnp.concatenate([v] * H, axis=0)                             # (HBS, D) v replicated per head
    vg = jnp.concatenate([v4, jnp.ones_like(v4)], axis=-1) * vgm      # (HBS, 2D): [masked V | denom]
    ad = jnp.dot(p, vg, preferred_element_type=f32)                   # (BS, 2D): [unnorm attn | denom]
    attn = ad[:, :D] * pl.reciprocal(ad[:, D:], approx=True)          # per-head softmax-normalized

    attn_out = jnp.dot(attn.astype(bf16), wout_ref[...], preferred_element_type=f32)   # (BS, D)

    # --- residual + LayerNorm, FFN, residual + LayerNorm (dropout = identity) ---
    h1 = _layernorm(x + attn_out, g1, be1)
    ff = _gelu(jnp.dot(h1.astype(bf16), w1_ref[...], preferred_element_type=f32) + bb1)
    ffn_out = jnp.dot(ff.astype(bf16), w2_ref[...], preferred_element_type=f32) + bb2
    out_ref[...] = _layernorm(h1 + ffn_out, g2, be2)


# ---------------- wrapper ----------------
def transformer_layer(x, params):
    (wqkv_t, wout_t, centers, log_scales, amps, gate,
     g1, be1, w1_t, bb1, w2_t, bb2, g2, be2) = params

    # ---- host-side constants / parameter layout plumbing (no x-dependent compute) ----
    # trajectory difference + distance-window matrices, block-diagonal over the fused batch;
    # rows at local position S-1 of `diff` are zero, so no cross-batch difference is ever formed.
    diff_np = np.zeros((BS, BS), np.float32)
    dw_np = np.zeros((BS, BS), np.float32)
    for b in range(B):
        for i in range(S - 1):
            diff_np[b * S + i, b * S + i] = -1.0
            diff_np[b * S + i, b * S + i + 1] = 1.0
        for pos in range(1, S):
            ws, we = max(0, pos - WINDOW), min(pos, S - 1)
            for j in range(ws, we):
                dw_np[b * S + pos, b * S + j] = 1.0 / (1.0 + abs(j - pos + 1))
    traj_c = jnp.asarray(np.concatenate([diff_np, dw_np], axis=0))        # (2BS, BS)

    # fused splat-distance RHS: block-diag [[head feature mask, 0], [0, centers^T]]
    hmask_np = (np.arange(D)[:, None] // DH == np.arange(HNS)[None, :] // NS).astype(np.float32)
    dist_rhs = jnp.zeros((2 * D, 2 * HNS), jnp.float32)
    dist_rhs = dist_rhs.at[:D, :HNS].set(jnp.asarray(hmask_np))
    for h in range(H):
        dist_rhs = dist_rhs.at[D + h * DH:D + (h + 1) * DH,
                               HNS + h * NS:HNS + (h + 1) * NS].set(centers[h].T)

    # attention constants: same-batch mask tiled per head, [V | denominator] feature masks,
    # per-head splat mask -- packed into a single (144, 64) constant.
    bm_np = (np.arange(BS)[:, None] // S ==
             (np.arange(HBS)[None, :] % BS) // S).astype(np.float32)      # (BS, HBS)
    feat_np = (np.arange(HBS)[:, None] // BS ==
               np.arange(D)[None, :] // DH).astype(np.float32)            # (HBS, D)
    sm_np = (np.arange(HBS)[:, None] // BS ==
             np.arange(HNS)[None, :] // NS).astype(np.float32)            # (HBS, HNS)
    attn_c_np = np.zeros((BS + 2 * HBS, HBS), np.float32)
    attn_c_np[:BS, :] = bm_np
    attn_c_np[BS:BS + HBS, :D] = feat_np
    attn_c_np[BS:BS + HBS, D:] = feat_np
    attn_c_np[BS + HBS:, :HNS] = sm_np
    attn_c = jnp.asarray(attn_c_np)

    # nine (1,N) parameter vectors packed into one (16, 128) VMEM tile (static row slices in-kernel)
    scales = jnp.exp(log_scales).reshape(HNS)
    pvec = jnp.zeros((16, 128), jnp.float32)
    pvec = pvec.at[0, :HNS].set(jnp.sum(centers * centers, axis=-1).reshape(HNS))   # ||c||^2
    pvec = pvec.at[1, :HNS].set(-0.5 / (scales * scales + 1e-8))                    # gaussian coef
    pvec = pvec.at[2, :HNS].set(jax.nn.sigmoid(amps).reshape(HNS))                  # amplitudes
    pvec = pvec.at[3, :D].set(g1.reshape(D))
    pvec = pvec.at[4, :D].set(be1.reshape(D))
    pvec = pvec.at[5, :D].set(bb2.reshape(D))
    pvec = pvec.at[6, :D].set(g2.reshape(D))
    pvec = pvec.at[7, :D].set(be2.reshape(D))
    pvec = pvec.at[8, :FFN].set(bb1.reshape(FFN))

    gate_s = jax.nn.sigmoid(gate).reshape(1, 1).astype(jnp.float32)

    bf16 = jnp.bfloat16
    wqkv_b, wout_b = wqkv_t.astype(bf16), wout_t.astype(bf16)
    w1_b, w2_b = w1_t.astype(bf16), w2_t.astype(bf16)

    x2 = x.reshape(BS, D)

    rep = lambda s: pl.BlockSpec(s, lambda i: (0, 0))
    in_specs = [
        rep((BS, D)),                                       # x (batch-fused)
        rep((2 * BS, BS)),                                  # [diff ; dw] trajectory matrices
        rep((D, 3 * D)),                                    # W_qkv^T   (bf16)
        rep((D, D)),                                        # W_out^T   (bf16)
        rep((2 * D, 2 * HNS)),                              # splat-distance block-diag RHS
        rep((BS + 2 * HBS, HBS)),                           # attention masks (batch/feature/splat)
        rep((D, FFN)),                                      # FFN W1^T  (bf16)
        rep((FFN, D)),                                      # FFN W2^T  (bf16)
        rep((16, 128)),                                     # packed small parameter vectors
        pl.BlockSpec(memory_space=pltpu.MemorySpace.SMEM),  # sigmoid(trajectory_gate) (1,1)
    ]
    grid_spec = pltpu.PrefetchScalarGridSpec(
        num_scalar_prefetch=0,
        grid=(1,),                                          # single TC step; do NOT core-split at BS=16
        in_specs=in_specs,
        out_specs=pl.BlockSpec((BS, D), lambda i: (0, 0)),
    )

    mm_flops = 2 * (BS * BS * D                              # diff @ x
                    + BS * BS * 2 * D                        # dw @ [num|den]
                    + BS * D * 3 * D                         # QKV
                    + 2 * BS * 2 * D * 2 * HNS               # fused distance matmul
                    + BS * HNS * HBS                         # head-batched scores
                    + BS * HBS * 2 * D                       # fused [P@V | denom]
                    + BS * D * D                             # out proj
                    + 2 * BS * D * FFN)                      # FFN
    transcendentals = 2 * BS * HNS + BS * HBS + 2 * BS * FFN + 8 * BS
    bytes_accessed = (4 * (2 * BS * D + 2 * BS * BS + 2 * D * 2 * HNS
                           + (BS + 2 * HBS) * HBS + 16 * 128 + 1)
                      + 2 * (D * 3 * D + D * D + D * FFN + FFN * D))

    fn = pl.pallas_call(
        transformer_layer_kernel,
        out_shape=jax.ShapeDtypeStruct((BS, D), jnp.float32),
        grid_spec=grid_spec,
        compiler_params=pltpu.CompilerParams(dimension_semantics=("arbitrary",)),
        cost_estimate=pl.CostEstimate(flops=mm_flops,
                                      transcendentals=transcendentals,
                                      bytes_accessed=bytes_accessed),
    )
    y = fn(x2, traj_c, wqkv_b, wout_b, dist_rhs, attn_c, w1_b, w2_b, pvec, gate_s)
    return y.reshape(B, S, D)


# ---------------- pure-JAX reference (mirrors the PyTorch code) ----------------
def ref_trajectories(x, window):
    _, s_len, _ = x.shape
    tv = x[:, 1:] - x[:, :-1]
    mag = jnp.sqrt(jnp.sum(tv * tv, axis=-1, keepdims=True))
    ntraj = tv / jnp.maximum(mag, 1e-8)
    magw = jnp.tanh(mag[..., 0])
    flows = jnp.zeros_like(x)
    for pos in range(1, s_len):
        ws = max(0, pos - window)
        we = min(pos, s_len - 1)
        if we > ws:
            wt = ntraj[:, ws:we]
            ww = magw[:, ws:we]
            dist = jnp.arange(ws, we, dtype=jnp.float32)
            dww = 1.0 / (1.0 + jnp.abs(dist - pos + 1))
            comb = ww * dww[None, :]
            ssum = jnp.maximum(jnp.sum(comb, axis=1, keepdims=True), 1e-8)
            nw = comb / ssum
            flows = flows.at[:, pos].set(jnp.sum(wt * nw[..., None], axis=1))
    return flows


def ref_forward(x, p):
    flows = ref_trajectories(x, WINDOW)
    qkv = x @ p["wqkv_t"]
    q, k, v = jnp.split(qkv, 3, axis=-1)
    to_heads = lambda t: t.reshape(B, S, H, DH).transpose(0, 2, 1, 3)
    q, k, v = to_heads(q), to_heads(k), to_heads(v)
    traj = to_heads(flows)
    gate = jax.nn.sigmoid(p["gate"][0, 0])
    q_e, k_e = q + gate * traj, k + gate * traj
    centers = p["centers"][None, :, None, :, :]
    scales = jnp.exp(p["log_scales"])[None, :, None, :]
    amps = jax.nn.sigmoid(p["amps"])[None, :, None, :]
    qd = jnp.sum((q_e[..., None, :] - centers) ** 2, axis=-1)
    kd = jnp.sum((k_e[..., None, :] - centers) ** 2, axis=-1)
    qw = amps * jnp.exp(-0.5 * qd / (scales ** 2 + 1e-8))
    kw = amps * jnp.exp(-0.5 * kd / (scales ** 2 + 1e-8))
    scores = jnp.einsum("bhis,bhjs->bhij", qw, kw)
    probs = jax.nn.softmax(scores, axis=-1)
    out = jnp.einsum("bhij,bhjd->bhid", probs, v)
    out = out.transpose(0, 2, 1, 3).reshape(B, S, D)
    attn_out = out @ p["wout_t"]

    def ln(h, g, b):
        mu = h.mean(-1, keepdims=True)
        var = ((h - mu) ** 2).mean(-1, keepdims=True)
        return (h - mu) / jnp.sqrt(var + LN_EPS) * g + b

    h1 = ln(x + attn_out, p["g1"], p["be1"])
    ff = jax.nn.gelu(h1 @ p["w1_t"] + p["bb1"], approximate=False)
    ffn_out = ff @ p["w2_t"] + p["bb2"]
    return ln(h1 + ffn_out, p["g2"], p["be2"])


# ---------------- main ----------------
if __name__ == "__main__":
    key = jax.random.PRNGKey(0)
    keys = jax.random.split(key, 8)

    x = jax.random.normal(keys[0], (B, S, D), jnp.float32)

    # deterministic parameter init (shapes follow the module's __init__)
    wqkv_t = jax.random.normal(keys[1], (D, 3 * D), jnp.float32) * 0.02
    wout_t = jax.random.normal(keys[2], (D, D), jnp.float32) * 0.02
    centers = jax.random.normal(keys[3], (H, NS, DH), jnp.float32) * 0.02
    log_scales = jnp.zeros((H, NS), jnp.float32)
    amps = jnp.ones((H, NS), jnp.float32)
    gate = jnp.full((1, 1), TRAJ_STRENGTH, jnp.float32)
    g1 = jnp.ones((1, D), jnp.float32)
    be1 = jnp.zeros((1, D), jnp.float32)
    w1_t = jax.random.normal(keys[4], (D, FFN), jnp.float32) * 0.02
    bb1 = jax.random.normal(keys[5], (1, FFN), jnp.float32) * 0.01
    w2_t = jax.random.normal(keys[6], (FFN, D), jnp.float32) * 0.02
    bb2 = jax.random.normal(keys[7], (1, D), jnp.float32) * 0.01
    g2 = jnp.ones((1, D), jnp.float32)
    be2 = jnp.zeros((1, D), jnp.float32)

    params = (wqkv_t, wout_t, centers, log_scales, amps, gate,
              g1, be1, w1_t, bb1, w2_t, bb2, g2, be2)

    out = transformer_layer(x, params)
    jax.block_until_ready(out)

    ref = ref_forward(x, dict(
        wqkv_t=wqkv_t, wout_t=wout_t, centers=centers, log_scales=log_scales,
        amps=amps, gate=gate, g1=g1, be1=be1, w1_t=w1_t, bb1=bb1,
        w2_t=w2_t, bb2=bb2, g2=g2, be2=be2))
    # bf16 GEMM operands + approx reciprocals: observed error ~5e-4; 5e-3 keeps margin while still
    # catching any structural mistake (those produce O(0.1-1) deviations).
    np.testing.assert_allclose(np.asarray(out), np.asarray(ref), rtol=5e-3, atol=5e-3)

    print("KERNEL_OK")
</pallas_src>

<mosaic_0001>
module attributes {stable_mosaic.version = 11 : i64} {
  func.func @transformer_layer_kernel(%arg0: i32, %arg1: memref<16x32xf32, #tpu.memory_space<vmem>>, %arg2: memref<32x16xf32, #tpu.memory_space<vmem>>, %arg3: memref<32x96xbf16, #tpu.memory_space<vmem>>, %arg4: memref<32x32xbf16, #tpu.memory_space<vmem>>, %arg5: memref<64x32xf32, #tpu.memory_space<vmem>>, %arg6: memref<144x64xf32, #tpu.memory_space<vmem>>, %arg7: memref<32x128xbf16, #tpu.memory_space<vmem>>, %arg8: memref<128x32xbf16, #tpu.memory_space<vmem>>, %arg9: memref<16x128xf32, #tpu.memory_space<vmem>>, %arg10: memref<1x1xf32, #tpu.memory_space<smem>>, %arg11: memref<16x32xf32, #tpu.memory_space<vmem>>) attributes {dimension_semantics = [#tpu.dimension_semantics<arbitrary>], iteration_bounds = array<i64: 1>, scalar_prefetch = 0 : i64, scratch_operands = 0 : i64, tpu.core_type = #tpu.core_type<tc>, window_params = [{pipeline_mode = #tpu.pipeline_mode<synchronous>, transform_indices = @transform_0, window_bounds = array<i64: 16, 32>}, {pipeline_mode = #tpu.pipeline_mode<synchronous>, transform_indices = @transform_1, window_bounds = array<i64: 32, 16>}, {pipeline_mode = #tpu.pipeline_mode<synchronous>, transform_indices = @transform_2, window_bounds = array<i64: 32, 96>}, {pipeline_mode = #tpu.pipeline_mode<synchronous>, transform_indices = @transform_3, window_bounds = array<i64: 32, 32>}, {pipeline_mode = #tpu.pipeline_mode<synchronous>, transform_indices = @transform_4, window_bounds = array<i64: 64, 32>}, {pipeline_mode = #tpu.pipeline_mode<synchronous>, transform_indices = @transform_5, window_bounds = array<i64: 144, 64>}, {pipeline_mode = #tpu.pipeline_mode<synchronous>, transform_indices = @transform_6, window_bounds = array<i64: 32, 128>}, {pipeline_mode = #tpu.pipeline_mode<synchronous>, transform_indices = @transform_7, window_bounds = array<i64: 128, 32>}, {pipeline_mode = #tpu.pipeline_mode<synchronous>, transform_indices = @transform_8, window_bounds = array<i64: 16, 128>}, {transform_indices = @transform_9, window_bounds = array<i64: 1, 1>}, {pipeline_mode = #tpu.pipeline_mode<synchronous>, transform_indices = @transform_10, window_bounds = array<i64: 16, 32>}]} {
    %c0 = arith.constant 0 : index
    %c0_0 = arith.constant 0 : index
    %0 = vector.load %arg1[%c0, %c0_0] : memref<16x32xf32, #tpu.memory_space<vmem>>, vector<16x32xf32>
    %c0_1 = arith.constant 0 : index
    %c0_2 = arith.constant 0 : index
    %1 = vector.load %arg9[%c0_1, %c0_2] : memref<16x128xf32, #tpu.memory_space<vmem>>, vector<16x128xf32>
    %2 = vector.extract_strided_slice %1 {offsets = [0, 0], sizes = [1, 16], strides = [1, 1]} : vector<16x128xf32> to vector<1x16xf32>
    %3 = vector.extract_strided_slice %1 {offsets = [1, 0], sizes = [1, 16], strides = [1, 1]} : vector<16x128xf32> to vector<1x16xf32>
    %4 = vector.extract_strided_slice %1 {offsets = [2, 0], sizes = [1, 16], strides = [1, 1]} : vector<16x128xf32> to vector<1x16xf32>
    %5 = vector.extract_strided_slice %1 {offsets = [3, 0], sizes = [1, 32], strides = [1, 1]} : vector<16x128xf32> to vector<1x32xf32>
    %6 = vector.extract_strided_slice %1 {offsets = [4, 0], sizes = [1, 32], strides = [1, 1]} : vector<16x128xf32> to vector<1x32xf32>
    %7 = vector.extract_strided_slice %1 {offsets = [5, 0], sizes = [1, 32], strides = [1, 1]} : vector<16x128xf32> to vector<1x32xf32>
    %8 = vector.extract_strided_slice %1 {offsets = [6, 0], sizes = [1, 32], strides = [1, 1]} : vector<16x128xf32> to vector<1x32xf32>
    %9 = vector.extract_strided_slice %1 {offsets = [7, 0], sizes = [1, 32], strides = [1, 1]} : vector<16x128xf32> to vector<1x32xf32>
    %10 = vector.extract_strided_slice %1 {offsets = [8, 0], sizes = [1, 128], strides = [1, 1]} : vector<16x128xf32> to vector<1x128xf32>
    %c0_3 = arith.constant 0 : index
    %c0_4 = arith.constant 0 : index
    %11 = memref.load %arg10[%c0_3, %c0_4] : memref<1x1xf32, #tpu.memory_space<smem>>
    %c0_5 = arith.constant 0 : index
    %c0_6 = arith.constant 0 : index
    %12 = vector.load %arg2[%c0_5, %c0_6] : memref<32x16xf32, #tpu.memory_space<vmem>>, vector<16x16xf32>
    %c16 = arith.constant 16 : index
    %c0_7 = arith.constant 0 : index
    %13 = vector.load %arg2[%c16, %c0_7] : memref<32x16xf32, #tpu.memory_space<vmem>>, vector<16x16xf32>
    %cst = arith.constant dense<0.000000e+00> : vector<16x32xf32>
    %14 = tpu.matmul %12, %0, %cst {dimension_numbers = #tpu.dot_dimension_numbers<[1], [0], [0], [1], [0, 0, 1, 1], [], []>} : vector<16x16xf32>, vector<16x32xf32>, vector<16x32xf32> -> vector<16x32xf32>
    %15 = arith.mulf %14, %14 : vector<16x32xf32>
    %cst_8 = arith.constant dense<0.000000e+00> : vector<16xf32>
    %16 = vector.multi_reduction <add>, %15, %cst_8 [1] : vector<16x32xf32> to vector<16xf32>
    %17 = vector.shape_cast %16 : vector<16xf32> to vector<16x1xf32>
    %18 = math.sqrt %17 : vector<16x1xf32>
    %19 = math.tanh %18 : vector<16x1xf32>
    %20 = vector.broadcast %11 : f32 to vector<16x1xf32>
    %21 = arith.mulf %20, %19 : vector<16x1xf32>
    %cst_9 = arith.constant 9.99999993E-9 : f32
    %22 = vector.broadcast %cst_9 : f32 to vector<16x1xf32>
    %23 = arith.maximumf %18, %22 : vector<16x1xf32>
    %24 = tpu.reciprocal %23 {approx = true} : vector<16x1xf32> -> vector<16x1xf32>
    %25 = arith.mulf %21, %24 : vector<16x1xf32>
    %26 = vector.broadcast %25 : vector<16x1xf32> to vector<16x32xf32>
    %27 = arith.mulf %14, %26 : vector<16x32xf32>
    %28 = vector.shape_cast %19 : vector<16x1xf32> to vector<16x1xf32>
    %29 = vector.broadcast %28 : vector<16x1xf32> to vector<16x32xf32>
    %30 = tpu.concatenate %27, %29 in 1 : vector<16x32xf32>, vector<16x32xf32> -> vector<16x64xf32>
    %cst_10 = arith.constant dense<0.000000e+00> : vector<16x64xf32>
    %31 = tpu.matmul %13, %30, %cst_10 {dimension_numbers = #tpu.dot_dimension_numbers<[1], [0], [0], [1], [0, 0, 1, 1], [], []>} : vector<16x16xf32>, vector<16x64xf32>, vector<16x64xf32> -> vector<16x64xf32>
    %32 = vector.extract_strided_slice %31 {offsets = [0, 0], sizes = [16, 32], strides = [1, 1]} : vector<16x64xf32> to vector<16x32xf32>
    %33 = vector.extract_strided_slice %31 {offsets = [0, 32], sizes = [16, 32], strides = [1, 1]} : vector<16x64xf32> to vector<16x32xf32>
    %cst_11 = arith.constant 9.99999993E-9 : f32
    %34 = vector.broadcast %cst_11 : f32 to vector<16x32xf32>
    %35 = arith.maximumf %33, %34 : vector<16x32xf32>
    %36 = tpu.reciprocal %35 {approx = true} : vector<16x32xf32> -> vector<16x32xf32>
    %37 = arith.mulf %32, %36 : vector<16x32xf32>
    %38 = arith.truncf %0 : vector<16x32xf32> to vector<16x32xbf16>
    %c0_12 = arith.constant 0 : index
    %c0_13 = arith.constant 0 : index
    %39 = vector.load %arg3[%c0_12, %c0_13] : memref<32x96xbf16, #tpu.memory_space<vmem>>, vector<32x96xbf16>
    %cst_14 = arith.constant dense<0.000000e+00> : vector<16x96xf32>
    %40 = tpu.matmul %38, %39, %cst_14 {dimension_numbers = #tpu.dot_dimension_numbers<[1], [0], [0], [1], [0, 0, 1, 1], [], []>} : vector<16x32xbf16>, vector<32x96xbf16>, vector<16x96xf32> -> vector<16x96xf32>
    %41 = vector.extract_strided_slice %40 {offsets = [0, 0], sizes = [16, 32], strides = [1, 1]} : vector<16x96xf32> to vector<16x32xf32>
    %42 = vector.extract_strided_slice %40 {offsets = [0, 32], sizes = [16, 32], strides = [1, 1]} : vector<16x96xf32> to vector<16x32xf32>
    %43 = vector.extract_strided_slice %40 {offsets = [0, 64], sizes = [16, 32], strides = [1, 1]} : vector<16x96xf32> to vector<16x32xf32>
    %44 = arith.addf %41, %37 : vector<16x32xf32>
    %45 = arith.addf %42, %37 : vector<16x32xf32>
    %46 = tpu.concatenate %44, %45 in 0 : vector<16x32xf32>, vector<16x32xf32> -> vector<32x32xf32>
    %47 = arith.mulf %46, %46 : vector<32x32xf32>
    %48 = tpu.concatenate %47, %46 in 1 : vector<32x32xf32>, vector<32x32xf32> -> vector<32x64xf32>
    %c0_15 = arith.constant 0 : index
    %c0_16 = arith.constant 0 : index
    %49 = vector.load %arg5[%c0_15, %c0_16] : memref<64x32xf32, #tpu.memory_space<vmem>>, vector<64x32xf32>
    %cst_17 = arith.constant dense<0.000000e+00> : vector<32x32xf32>
    %50 = tpu.matmul %48, %49, %cst_17 {dimension_numbers = #tpu.dot_dimension_numbers<[1], [0], [0], [1], [0, 0, 1, 1], [], []>} : vector<32x64xf32>, vector<64x32xf32>, vector<32x32xf32> -> vector<32x32xf32>
    %51 = vector.extract_strided_slice %50 {offsets = [0, 0], sizes = [32, 16], strides = [1, 1]} : vector<32x32xf32> to vector<32x16xf32>
    %52 = vector.extract_strided_slice %50 {offsets = [0, 16], sizes = [32, 16], strides = [1, 1]} : vector<32x32xf32> to vector<32x16xf32>
    %cst_18 = arith.constant 2.000000e+00 : f32
    %53 = vector.broadcast %cst_18 : f32 to vector<32x16xf32>
    %54 = arith.mulf %53, %52 : vector<32x16xf32>
    %55 = arith.subf %51, %54 : vector<32x16xf32>
    %56 = vector.broadcast %2 : vector<1x16xf32> to vector<32x16xf32>
    %57 = arith.addf %55, %56 : vector<32x16xf32>
    %58 = vector.broadcast %3 : vector<1x16xf32> to vector<32x16xf32>
    %59 = arith.mulf %58, %57 : vector<32x16xf32>
    %60 = math.exp %59 : vector<32x16xf32>
    %61 = vector.broadcast %4 : vector<1x16xf32> to vector<32x16xf32>
    %62 = arith.mulf %61, %60 : vector<32x16xf32>
    %63 = vector.extract_strided_slice %62 {offsets = [0, 0], sizes = [16, 16], strides = [1, 1]} : vector<32x16xf32> to vector<16x16xf32>
    %64 = vector.extract_strided_slice %62 {offsets = [16, 0], sizes = [16, 16], strides = [1, 1]} : vector<32x16xf32> to vector<16x16xf32>
    %c0_19 = arith.constant 0 : index
    %c0_20 = arith.constant 0 : index
    %65 = vector.load %arg6[%c0_19, %c0_20] : memref<144x64xf32, #tpu.memory_space<vmem>>, vector<16x64xf32>
    %c16_21 = arith.constant 16 : index
    %c0_22 = arith.constant 0 : index
    %66 = vector.load %arg6[%c16_21, %c0_22] : memref<144x64xf32, #tpu.memory_space<vmem>>, vector<64x64xf32>
    %c80 = arith.constant 80 : index
    %c0_23 = arith.constant 0 : index
    %67 = vector.load %arg6[%c80, %c0_23] : memref<144x64xf32, #tpu.memory_space<vmem>>, vector<64x16xf32>
    %68 = tpu.concatenate %64, %64, %64, %64 in 0 : vector<16x16xf32>, vector<16x16xf32>, vector<16x16xf32>, vector<16x16xf32> -> vector<64x16xf32>
    %69 = arith.mulf %68, %67 : vector<64x16xf32>
    %cst_24 = arith.constant dense<0.000000e+00> : vector<16x64xf32>
    %70 = tpu.matmul %63, %69, %cst_24 {dimension_numbers = #tpu.dot_dimension_numbers<[1], [1], [0], [0], [0, 0, 1, 0], [], []>} : vector<16x16xf32>, vector<64x16xf32>, vector<16x64xf32> -> vector<16x64xf32>
    %71 = math.exp %70 : vector<16x64xf32>
    %72 = arith.mulf %71, %65 : vector<16x64xf32>
    %73 = tpu.concatenate %43, %43, %43, %43 in 0 : vector<16x32xf32>, vector<16x32xf32>, vector<16x32xf32>, vector<16x32xf32> -> vector<64x32xf32>
    %cst_25 = arith.constant 1.000000e+00 : f32
    %74 = vector.broadcast %cst_25 : f32 to vector<64x32xf32>
    %75 = tpu.concatenate %73, %74 in 1 : vector<64x32xf32>, vector<64x32xf32> -> vector<64x64xf32>
    %76 = arith.mulf %75, %66 : vector<64x64xf32>
    %cst_26 = arith.constant dense<0.000000e+00> : vector<16x64xf32>
    %77 = tpu.matmul %72, %76, %cst_26 {dimension_numbers = #tpu.dot_dimension_numbers<[1], [0], [0], [1], [0, 0, 1, 1], [], []>} : vector<16x64xf32>, vector<64x64xf32>, vector<16x64xf32> -> vector<16x64xf32>
    %78 = vector.extract_strided_slice %77 {offsets = [0, 0], sizes = [16, 32], strides = [1, 1]} : vector<16x64xf32> to vector<16x32xf32>
    %79 = vector.extract_strided_slice %77 {offsets = [0, 32], sizes = [16, 32], strides = [1, 1]} : vector<16x64xf32> to vector<16x32xf32>
    %80 = tpu.reciprocal %79 {approx = true} : vector<16x32xf32> -> vector<16x32xf32>
    %81 = arith.mulf %78, %80 : vector<16x32xf32>
    %82 = arith.truncf %81 : vector<16x32xf32> to vector<16x32xbf16>
    %c0_27 = arith.constant 0 : index
    %c0_28 = arith.constant 0 : index
    %83 = vector.load %arg4[%c0_27, %c0_28] : memref<32x32xbf16, #tpu.memory_space<vmem>>, vector<32x32xbf16>
    %cst_29 = arith.constant dense<0.000000e+00> : vector<16x32xf32>
    %84 = tpu.matmul %82, %83, %cst_29 {dimension_numbers = #tpu.dot_dimension_numbers<[1], [0], [0], [1], [0, 0, 1, 1], [], []>} : vector<16x32xbf16>, vector<32x32xbf16>, vector<16x32xf32> -> vector<16x32xf32>
    %85 = arith.addf %0, %84 : vector<16x32xf32>
    %cst_30 = arith.constant dense<0.000000e+00> : vector<16xf32>
    %86 = vector.multi_reduction <add>, %85, %cst_30 [1] : vector<16x32xf32> to vector<16xf32>
    %87 = vector.shape_cast %86 : vector<16xf32> to vector<16x1xf32>
    %cst_31 = arith.constant 3.200000e+01 : f32
    %88 = vector.broadcast %cst_31 : f32 to vector<16x1xf32>
    %89 = arith.divf %87, %88 : vector<16x1xf32>
    %90 = vector.broadcast %89 : vector<16x1xf32> to vector<16x32xf32>
    %91 = arith.subf %85, %90 : vector<16x32xf32>
    %92 = arith.mulf %91, %91 : vector<16x32xf32>
    %cst_32 = arith.constant dense<0.000000e+00> : vector<16xf32>
    %93 = vector.multi_reduction <add>, %92, %cst_32 [1] : vector<16x32xf32> to vector<16xf32>
    %94 = vector.shape_cast %93 : vector<16xf32> to vector<16x1xf32>
    %cst_33 = arith.constant 3.200000e+01 : f32
    %95 = vector.broadcast %cst_33 : f32 to vector<16x1xf32>
    %96 = arith.divf %94, %95 : vector<16x1xf32>
    %97 = vector.broadcast %89 : vector<16x1xf32> to vector<16x32xf32>
    %98 = arith.subf %85, %97 : vector<16x32xf32>
    %cst_34 = arith.constant 9.99999974E-6 : f32
    %99 = vector.broadcast %cst_34 : f32 to vector<16x1xf32>
    %100 = arith.addf %96, %99 : vector<16x1xf32>
    %101 = math.rsqrt %100 : vector<16x1xf32>
    %102 = vector.broadcast %101 : vector<16x1xf32> to vector<16x32xf32>
    %103 = arith.mulf %98, %102 : vector<16x32xf32>
    %104 = vector.broadcast %5 : vector<1x32xf32> to vector<16x32xf32>
    %105 = arith.mulf %103, %104 : vector<16x32xf32>
    %106 = vector.broadcast %6 : vector<1x32xf32> to vector<16x32xf32>
    %107 = arith.addf %105, %106 : vector<16x32xf32>
    %108 = arith.truncf %107 : vector<16x32xf32> to vector<16x32xbf16>
    %c0_35 = arith.constant 0 : index
    %c0_36 = arith.constant 0 : index
    %109 = vector.load %arg7[%c0_35, %c0_36] : memref<32x128xbf16, #tpu.memory_space<vmem>>, vector<32x128xbf16>
    %cst_37 = arith.constant dense<0.000000e+00> : vector<16x128xf32>
    %110 = tpu.matmul %108, %109, %cst_37 {dimension_numbers = #tpu.dot_dimension_numbers<[1], [0], [0], [1], [0, 0, 1, 1], [], []>} : vector<16x32xbf16>, vector<32x128xbf16>, vector<16x128xf32> -> vector<16x128xf32>
    %111 = vector.broadcast %10 : vector<1x128xf32> to vector<16x128xf32>
    %112 = arith.addf %110, %111 : vector<16x128xf32>
    %cst_38 = arith.constant 5.000000e-01 : f32
    %113 = vector.broadcast %cst_38 : f32 to vector<16x128xf32>
    %114 = arith.mulf %113, %112 : vector<16x128xf32>
    %cst_39 = arith.constant 0.707106769 : f32
    %115 = vector.broadcast %cst_39 : f32 to vector<16x128xf32>
    %116 = arith.mulf %112, %115 : vector<16x128xf32>
    %cst_40 = arith.constant 0.000000e+00 : f32
    %117 = vector.broadcast %cst_40 : f32 to vector<16x128xf32>
    %118 = arith.cmpf oge, %116, %117 : vector<16x128xf32>
    %cst_41 = arith.constant 1.000000e+00 : f32
    %cst_42 = arith.constant -1.000000e+00 : f32
    %119 = vector.broadcast %cst_41 : f32 to vector<16x128xf32>
    %120 = vector.broadcast %cst_42 : f32 to vector<16x128xf32>
    %121 = arith.select %118, %119, %120 : vector<16x128xi1>, vector<16x128xf32>
    %122 = math.absf %116 : vector<16x128xf32>
    %cst_43 = arith.constant 0.327591091 : f32
    %123 = vector.broadcast %cst_43 : f32 to vector<16x128xf32>
    %124 = arith.mulf %123, %122 : vector<16x128xf32>
    %cst_44 = arith.constant 1.000000e+00 : f32
    %125 = vector.broadcast %cst_44 : f32 to vector<16x128xf32>
    %126 = arith.addf %125, %124 : vector<16x128xf32>
    %127 = tpu.reciprocal %126 {approx = true} : vector<16x128xf32> -> vector<16x128xf32>
    %cst_45 = arith.constant 1.06140542 : f32
    %128 = vector.broadcast %cst_45 : f32 to vector<16x128xf32>
    %129 = arith.mulf %128, %127 : vector<16x128xf32>
    %cst_46 = arith.constant -1.45315206 : f32
    %130 = vector.broadcast %cst_46 : f32 to vector<16x128xf32>
    %131 = arith.addf %129, %130 : vector<16x128xf32>
    %132 = arith.mulf %131, %127 : vector<16x128xf32>
    %cst_47 = arith.constant 1.42141378 : f32
    %133 = vector.broadcast %cst_47 : f32 to vector<16x128xf32>
    %134 = arith.addf %132, %133 : vector<16x128xf32>
    %135 = arith.mulf %134, %127 : vector<16x128xf32>
    %cst_48 = arith.constant -0.284496725 : f32
    %136 = vector.broadcast %cst_48 : f32 to vector<16x128xf32>
    %137 = arith.addf %135, %136 : vector<16x128xf32>
    %138 = arith.mulf %137, %127 : vector<16x128xf32>
    %cst_49 = arith.constant 0.254829586 : f32
    %139 = vector.broadcast %cst_49 : f32 to vector<16x128xf32>
    %140 = arith.addf %138, %139 : vector<16x128xf32>
    %141 = arith.mulf %140, %127 : vector<16x128xf32>
    %cst_50 = arith.constant 0.000000e+00 : f32
    %142 = vector.broadcast %cst_50 : f32 to vector<16x128xf32>
    %143 = arith.subf %142, %122 : vector<16x128xf32>
    %144 = arith.mulf %143, %122 : vector<16x128xf32>
    %145 = math.exp %144 : vector<16x128xf32>
    %146 = arith.mulf %141, %145 : vector<16x128xf32>
    %cst_51 = arith.constant 1.000000e+00 : f32
    %147 = vector.broadcast %cst_51 : f32 to vector<16x128xf32>
    %148 = arith.subf %147, %146 : vector<16x128xf32>
    %149 = arith.mulf %121, %148 : vector<16x128xf32>
    %cst_52 = arith.constant 1.000000e+00 : f32
    %150 = vector.broadcast %cst_52 : f32 to vector<16x128xf32>
    %151 = arith.addf %150, %149 : vector<16x128xf32>
    %152 = arith.mulf %114, %151 : vector<16x128xf32>
    %153 = arith.truncf %152 : vector<16x128xf32> to vector<16x128xbf16>
    %c0_53 = arith.constant 0 : index
    %c0_54 = arith.constant 0 : index
    %154 = vector.load %arg8[%c0_53, %c0_54] : memref<128x32xbf16, #tpu.memory_space<vmem>>, vector<128x32xbf16>
    %cst_55 = arith.constant dense<0.000000e+00> : vector<16x32xf32>
    %155 = tpu.matmul %153, %154, %cst_55 {dimension_numbers = #tpu.dot_dimension_numbers<[1], [0], [0], [1], [0, 0, 1, 1], [], []>} : vector<16x128xbf16>, vector<128x32xbf16>, vector<16x32xf32> -> vector<16x32xf32>
    %156 = vector.broadcast %7 : vector<1x32xf32> to vector<16x32xf32>
    %157 = arith.addf %155, %156 : vector<16x32xf32>
    %158 = arith.addf %107, %157 : vector<16x32xf32>
    %cst_56 = arith.constant dense<0.000000e+00> : vector<16xf32>
    %159 = vector.multi_reduction <add>, %158, %cst_56 [1] : vector<16x32xf32> to vector<16xf32>
    %160 = vector.shape_cast %159 : vector<16xf32> to vector<16x1xf32>
    %cst_57 = arith.constant 3.200000e+01 : f32
    %161 = vector.broadcast %cst_57 : f32 to vector<16x1xf32>
    %162 = arith.divf %160, %161 : vector<16x1xf32>
    %163 = vector.broadcast %162 : vector<16x1xf32> to vector<16x32xf32>
    %164 = arith.subf %158, %163 : vector<16x32xf32>
    %165 = arith.mulf %164, %164 : vector<16x32xf32>
    %cst_58 = arith.constant dense<0.000000e+00> : vector<16xf32>
    %166 = vector.multi_reduction <add>, %165, %cst_58 [1] : vector<16x32xf32> to vector<16xf32>
    %167 = vector.shape_cast %166 : vector<16xf32> to vector<16x1xf32>
    %cst_59 = arith.constant 3.200000e+01 : f32
    %168 = vector.broadcast %cst_59 : f32 to vector<16x1xf32>
    %169 = arith.divf %167, %168 : vector<16x1xf32>
    %170 = vector.broadcast %162 : vector<16x1xf32> to vector<16x32xf32>
    %171 = arith.subf %158, %170 : vector<16x32xf32>
    %cst_60 = arith.constant 9.99999974E-6 : f32
    %172 = vector.broadcast %cst_60 : f32 to vector<16x1xf32>
    %173 = arith.addf %169, %172 : vector<16x1xf32>
    %174 = math.rsqrt %173 : vector<16x1xf32>
    %175 = vector.broadcast %174 : vector<16x1xf32> to vector<16x32xf32>
    %176 = arith.mulf %171, %175 : vector<16x32xf32>
    %177 = vector.broadcast %8 : vector<1x32xf32> to vector<16x32xf32>
    %178 = arith.mulf %176, %177 : vector<16x32xf32>
    %179 = vector.broadcast %9 : vector<1x32xf32> to vector<16x32xf32>
    %180 = arith.addf %178, %179 : vector<16x32xf32>
    %c0_61 = arith.constant 0 : index
    %c0_62 = arith.constant 0 : index
    %181 = vector.load %arg11[%c0_61, %c0_62] : memref<16x32xf32, #tpu.memory_space<vmem>>, vector<16x32xf32>
    tpu.vector_store %arg11[%c0_61, %c0_62], %180 {strides = array<i32>} : memref<16x32xf32, #tpu.memory_space<vmem>>, vector<16x32xf32>,
    return
  }
  func.func @transform_0(%arg0: i32) -> (i32, i32) {
    %c0_i32 = arith.constant 0 : i32
    %c0_i32_0 = arith.constant 0 : i32
    %c0_i32_1 = arith.constant 0 : i32
    return %c0_i32, %c0_i32_0 : i32, i32
  }
  func.func @transform_1(%arg0: i32) -> (i32, i32) {
    %c0_i32 = arith.constant 0 : i32
    %c0_i32_0 = arith.constant 0 : i32
    %c0_i32_1 = arith.constant 0 : i32
    return %c0_i32, %c0_i32_0 : i32, i32
  }
  func.func @transform_2(%arg0: i32) -> (i32, i32) {
    %c0_i32 = arith.constant 0 : i32
    %c0_i32_0 = arith.constant 0 : i32
    %c0_i32_1 = arith.constant 0 : i32
    return %c0_i32, %c0_i32_0 : i32, i32
  }
  func.func @transform_3(%arg0: i32) -> (i32, i32) {
    %c0_i32 = arith.constant 0 : i32
    %c0_i32_0 = arith.constant 0 : i32
    %c0_i32_1 = arith.constant 0 : i32
    return %c0_i32, %c0_i32_0 : i32, i32
  }
  func.func @transform_4(%arg0: i32) -> (i32, i32) {
    %c0_i32 = arith.constant 0 : i32
    %c0_i32_0 = arith.constant 0 : i32
    %c0_i32_1 = arith.constant 0 : i32
    return %c0_i32, %c0_i32_0 : i32, i32
  }
  func.func @transform_5(%arg0: i32) -> (i32, i32) {
    %c0_i32 = arith.constant 0 : i32
    %c0_i32_0 = arith.constant 0 : i32
    %c0_i32_1 = arith.constant 0 : i32
    return %c0_i32, %c0_i32_0 : i32, i32
  }
  func.func @transform_6(%arg0: i32) -> (i32, i32) {
    %c0_i32 = arith.constant 0 : i32
    %c0_i32_0 = arith.constant 0 : i32
    %c0_i32_1 = arith.constant 0 : i32
    return %c0_i32, %c0_i32_0 : i32, i32
  }
  func.func @transform_7(%arg0: i32) -> (i32, i32) {
    %c0_i32 = arith.constant 0 : i32
    %c0_i32_0 = arith.constant 0 : i32
    %c0_i32_1 = arith.constant 0 : i32
    return %c0_i32, %c0_i32_0 : i32, i32
  }
  func.func @transform_8(%arg0: i32) -> (i32, i32) {
    %c0_i32 = arith.constant 0 : i32
    %c0_i32_0 = arith.constant 0 : i32
    %c0_i32_1 = arith.constant 0 : i32
    return %c0_i32, %c0_i32_0 : i32, i32
  }
  func.func @transform_9(%arg0: i32) -> (i32, i32) {
    %c0_i32 = arith.constant 0 : i32
    %c0_i32_0 = arith.constant 0 : i32
    %c0_i32_1 = arith.constant 0 : i32
    return %c0_i32, %c0_i32_0 : i32, i32
  }
  func.func @transform_10(%arg0: i32) -> (i32, i32) {
    %c0_i32 = arith.constant 0 : i32
    %c0_i32_0 = arith.constant 0 : i32
    %c0_i32_1 = arith.constant 0 : i32
    return %c0_i32, %c0_i32_0 : i32, i32
  }
}

</mosaic_0001>

<llo_original>
// kernel: tpu_custom_call.1
$region0: #{tpu_custom_call.1}
  #allocation0 [shape = 'u32[]', space=smem, size = 0x4, offset = 0x4, fixed_abs, tag = 'smem constant byte address 0x4 - core index']
  #allocation1 [shape = 'u32[144,128]{1,0:T(1,128)}', space=vmem, size = 0x12000, scoped, tag = 'internal scratch']
  #allocation2 [shape = 'f32[1,1]{1,0:T(1,128)S(6)}', space=smem, size = 0x200, scoped, tag = 'scoped memory for tpu_custom_call.1']
  %s0 = inlined_call_operand.vmem [shape: f32[16,32], index: 0, kind: input, shape index: {}]
  %s1 = inlined_call_operand.vmem [shape: f32[32,16], index: 1, kind: input, shape index: {}]
  %s2 = inlined_call_operand.vmem [shape: bf16[32,96], index: 2, kind: input, shape index: {}]
  %s3 = inlined_call_operand.vmem [shape: bf16[32,32], index: 3, kind: input, shape index: {}]
  %s4 = inlined_call_operand.vmem [shape: f32[64,32], index: 4, kind: input, shape index: {}]
  %s5 = inlined_call_operand.vmem [shape: f32[144,64], index: 5, kind: input, shape index: {}]
  %s6 = inlined_call_operand.vmem [shape: bf16[32,128], index: 6, kind: input, shape index: {}]
  %s7 = inlined_call_operand.vmem [shape: bf16[128,32], index: 7, kind: input, shape index: {}]
  %s8 = inlined_call_operand.vmem [shape: f32[16,128], index: 8, kind: input, shape index: {}]
  %s9 = inlined_call_operand.<no memory space> [shape: f32[1,1], index: 9, kind: input, shape index: {}]
  %s10 = inlined_call_operand.hbm [shape: f32[16,32], index: 10, kind: output, shape index: {}]
  %s11 = sld [smem:[#allocation0]]
  $region50: #{tpu_custom_call.1} parent=0
    _
  %s13 = ssub.s32 1, %s11
  %s14 = scalar_select 0, %s13, %s11
  %15 = sst [smem:[#allocation2]] %s9
  $region1: #{tpu_custom_call.1} parent=0
    #allocation3 [shape = 'u8[8192]{0}', space=vmem, size = 0x2000, scoped, tag = 'output window, operand 0, single buffered']
    #allocation4 [shape = 's32[1]{0}', space=sflag, size = 0x4, scoped, tag = 'scoped memory for tpu_custom_call.1']
    %16 = vsyncpa [#allocation4], 0
    // Predicated region
    $region2: #{tpu_custom_call.1} parent=1 // pred_check
      _
    $region3: #{tpu_custom_call.1} parent=1 // pred_check_branch
      %18 = sbr.rel (0) target = $region5
    $region4: #{tpu_custom_call.1} parent=1 // pred_region
      _
    $region5: #{tpu_custom_call.1} parent=1 // pred_fallthru
      _
    // Predicated region
    $region6: #{tpu_custom_call.1} parent=1 // pred_check
      _
    $region7: #{tpu_custom_call.1} parent=1 // pred_check_branch
      %20 = sbr.rel (0) target = $region9
    $region8: #{tpu_custom_call.1} parent=1 // pred_region
      _
    $region9: #{tpu_custom_call.1} parent=1 // pred_fallthru
      _
    // Predicated region
    $region10: #{tpu_custom_call.1} parent=1 // pred_check
      _
    $region11: #{tpu_custom_call.1} parent=1 // pred_check_branch
      %22 = sbr.rel (0) target = $region13
    $region12: #{tpu_custom_call.1} parent=1 // pred_region
      _
    $region13: #{tpu_custom_call.1} parent=1 // pred_fallthru
      _
    // Predicated region
    $region14: #{tpu_custom_call.1} parent=1 // pred_check
      _
    $region15: #{tpu_custom_call.1} parent=1 // pred_check_branch
      %24 = sbr.rel (0) target = $region17
    $region16: #{tpu_custom_call.1} parent=1 // pred_region
      _
    $region17: #{tpu_custom_call.1} parent=1 // pred_fallthru
      _
    // Predicated region
    $region18: #{tpu_custom_call.1} parent=1 // pred_check
      _
    $region19: #{tpu_custom_call.1} parent=1 // pred_check_branch
      %26 = sbr.rel (0) target = $region21
    $region20: #{tpu_custom_call.1} parent=1 // pred_region
      _
    $region21: #{tpu_custom_call.1} parent=1 // pred_fallthru
      _
    // Predicated region
    $region22: #{tpu_custom_call.1} parent=1 // pred_check
      _
    $region23: #{tpu_custom_call.1} parent=1 // pred_check_branch
      %28 = sbr.rel (0) target = $region25
    $region24: #{tpu_custom_call.1} parent=1 // pred_region
      _
    $region25: #{tpu_custom_call.1} parent=1 // pred_fallthru
      _
    // Predicated region
    $region26: #{tpu_custom_call.1} parent=1 // pred_check
      _
    $region27: #{tpu_custom_call.1} parent=1 // pred_check_branch
      %30 = sbr.rel (0) target = $region29
    $region28: #{tpu_custom_call.1} parent=1 // pred_region
      _
    $region29: #{tpu_custom_call.1} parent=1 // pred_fallthru
      _
    // Predicated region
    $region30: #{tpu_custom_call.1} parent=1 // pred_check
      _
    $region31: #{tpu_custom_call.1} parent=1 // pred_check_branch
      %32 = sbr.rel (0) target = $region33
    $region32: #{tpu_custom_call.1} parent=1 // pred_region
      _
    $region33: #{tpu_custom_call.1} parent=1 // pred_fallthru
      _
    // Predicated region
    $region34: #{tpu_custom_call.1} parent=1 // pred_check
      _
    $region35: #{tpu_custom_call.1} parent=1 // pred_check_branch
      %34 = sbr.rel (0) target = $region37
    $region36: #{tpu_custom_call.1} parent=1 // pred_region
      _
    $region37: #{tpu_custom_call.1} parent=1 // pred_fallthru
      _
    // Predicated region
    $region38: #{tpu_custom_call.1} parent=1 // pred_check
      _
    $region39: #{tpu_custom_call.1} parent=1 // pred_check_branch
      %36 = sbr.rel (0) target = $region41
    $region40: #{tpu_custom_call.1} parent=1 // pred_region
      _
    $region41: #{tpu_custom_call.1} parent=1 // pred_fallthru
      _
    %v38 = vld [vmem:[%s0] sm:$0xff]
    %v39 = vld [vmem:[%s0 + $0x8] sm:$0xff]
    %v40 = vld [vmem:[%s8] sm:$0xff]
    %v41 = vld [vmem:[%s8 + $0x8] sm:$0xff]
    %s42 = sld [smem:[#allocation2]]
    %v43 = vld [vmem:[%s1] sm:$0xff]
    %v44 = vld [vmem:[%s1 + $0x8] sm:$0xff]
    %v45 = vld [vmem:[%s1 + $0x10] sm:$0xff]
    %v46 = vld [vmem:[%s1 + $0x18] sm:$0xff]
    %vm47 = vcmask 130048
    %v49 = vsel %vm47, %v43, 0
    %v52 = vsel %vm47, %v44, 0
    %54 = vmatprep.subr.mxu0 0.0
    %55 = vmatpush1.msra.mxu0 %v38
    %56 = vmatprep.subr.mxu0 0.0
    %57 = vmatpush1.msra.mxu0 %v39
    %58 = vmatprep.subr.mxu0 0.0
    %59 = vmatpush1.msra.mxu0 0.0
    %60 = vmatprep.subr.mxu0 0.0
    %61 = vmatpush1.msra.mxu0 0.0
    %62 = vmatprep.subr.mxu0 0.0
    %63 = vmatpush1.msra.mxu0 0.0
    %64 = vmatprep.subr.mxu0 0.0
    %65 = vmatpush1.msra.mxu0 0.0
    %66 = vmatprep.subr.mxu0 0.0
    %67 = vmatpush1.msra.mxu0 0.0
    %68 = vmatprep.subr.mxu0 0.0
    %69 = vmatpush1.msra.mxu0 0.0
    %70 = vmatprep.subr.mxu0 0.0
    %71 = vmatpush1.msra.mxu0 0.0
    %72 = vmatprep.subr.mxu0 0.0
    %73 = vmatpush1.msra.mxu0 0.0
    %74 = vmatprep.subr.mxu0 0.0
    %75 = vmatpush1.msra.mxu0 0.0
    %76 = vmatprep.subr.mxu0 0.0
    %77 = vmatpush1.msra.mxu0 0.0
    %78 = vmatprep.subr.mxu0 0.0
    %79 = vmatpush1.msra.mxu0 0.0
    %80 = vmatprep.subr.mxu0 0.0
    %81 = vmatpush1.msra.mxu0 0.0
    %82 = vmatprep.subr.mxu0 0.0
    %83 = vmatpush1.msra.mxu0 0.0
    %84 = vmatprep.subr.mxu0 0.0
    %85 = vmatpush1.msra.mxu0 0.0
    %86 = vmatprep.subr.mxu0 0.0
    %87 = vmatpush1.msra.mxu0 0.0
    %88 = vmatprep.subr.mxu0 0.0
    %89 = vmatpush1.msra.mxu0 0.0
    %90 = vmatprep.subr.mxu0 0.0
    %91 = vmatpush1.msra.mxu0 0.0
    %92 = vmatprep.subr.mxu0 0.0
    %93 = vmatpush1.msra.mxu0 0.0
    %94 = vmatprep.subr.mxu0 0.0
    %95 = vmatpush1.msra.mxu0 0.0
    %96 = vmatprep.subr.mxu0 0.0
    %97 = vmatpush1.msra.mxu0 0.0
    %98 = vmatprep.subr.mxu0 0.0
    %99 = vmatpush1.msra.mxu0 0.0
    %100 = vmatprep.subr.mxu0 0.0
    %101 = vmatpush1.msra.mxu0 0.0
    %102 = vmatprep.subr.mxu0 0.0
    %103 = vmatpush1.msra.mxu0 0.0
    %104 = vmatprep.subr.mxu0 0.0
    %105 = vmatpush1.msra.mxu0 0.0
    %106 = vmatprep.subr.mxu0 0.0
    %107 = vmatpush1.msra.mxu0 0.0
    %108 = vmatprep.subr.mxu0 0.0
    %109 = vmatpush1.msra.mxu0 0.0
    %110 = vmatprep.subr.mxu0 0.0
    %111 = vmatpush1.msra.mxu0 0.0
    %112 = vmatprep.subr.mxu0 0.0
    %113 = vmatpush1.msra.mxu0 0.0
    %114 = vmatprep.subr.mxu0 0.0
    %115 = vmatpush1.msra.mxu0 0.0
    %116 = vmatprep.subr.mxu0 0.0
    %117 = vmatpush1.msra.mxu0 0.0
    %118 = vmatprep.mubr.f32.mxu0 0.0
    %119 = vmatmul.mubr.f32.gmra.mrb[0].mxu0 %v49
    %v120 = vpop.f32.mrb[0].mxu0
    %v121 = vadd.f32 0.0, %v120
    %v122 = vpop.f32.mrb[0].mxu0
    %123 = vmatprep.mubr.f32.mxu0 0.0
    %124 = vmatmul.mubr.f32.gmra.mrb[0].mxu0 %v52
    %v125 = vpop.f32.mrb[0].mxu0
    %v126 = vadd.f32 0.0, %v125
    %v127 = vpop.f32.mrb[0].mxu0
    %128 = vdwg.mxu0
    %v129 = vmul.f32 %v121, %v121
    %v130 = vmul.f32 %v126, %v126
    %vm131 = vcmask 261120
    %v132 = vsel %vm131, %v129, 0.0
    %133 = vadd.xlane.f32.xlu0 %v132
    %v134 = vpop.xlane.xlu0 %133
    %v135 = vsel %vm131, %v130, 0.0
    %136 = vadd.xlane.f32.xlu0 %v135
    %v137 = vpop.xlane.xlu0 %136
    %v138 = vrsqrt.pop %v134
    %v139 = vmul.f32 %v134, %v138
    %vm140 = vcmp.eq.f32.partialorder %v134, inf
    %v141 = vsel %vm140, %v134, %v139
    %vm142 = vcmp.eq.f32.partialorder %v134, 0.0
    %v143 = vand.u32 %v134, 2147483648
    %v144 = vsel %vm142, %v143, %v141
    %v145 = vrsqrt.pop %v137
    %v146 = vmul.f32 %v137, %v145
    %vm147 = vcmp.eq.f32.partialorder %v137, inf
    %v148 = vsel %vm147, %v137, %v146
    %vm149 = vcmp.eq.f32.partialorder %v137, 0.0
    %v150 = vand.u32 %v137, 2147483648
    %v151 = vsel %vm149, %v150, %v148
    %v152 = vtanh.pop %v144
    %v153 = vtanh.pop %v151
    %v154 = vstv %s42
    %v155 = vmul.f32 %v154, %v152
    %v156 = vmul.f32 %v154, %v153
    %v157 = vmax.f32 %v144, 1e-08
    %v158 = vmax.f32 %v151, 1e-08
    %v159 = vrcp.pop %v157
    %v160 = vrcp.pop %v158
    %v161 = vmul.f32 %v155, %v159
    %v162 = vmul.f32 %v156, %v160
    %v163 = vmul.f32 %v121, %v161
    %v164 = vmul.f32 %v126, %v162
    %v165 = vsel %vm131, %v163, %v152
    %v166 = vsel %vm131, %v164, %v153
    %v168 = vsel %vm47, %v45, 0
    %v171 = vsel %vm47, %v46, 0
    %173 = vmatprep.subr.mxu0 0.0
    %174 = vmatpush1.msra.mxu0 %v165
    %175 = vmatprep.subr.mxu0 0.0
    %176 = vmatpush1.msra.mxu0 %v166
    %177 = vmatprep.subr.mxu0 0.0
    %178 = vmatpush1.msra.mxu0 0.0
    %179 = vmatprep.subr.mxu0 0.0
    %180 = vmatpush1.msra.mxu0 0.0
    %181 = vmatprep.subr.mxu0 0.0
    %182 = vmatpush1.msra.mxu0 0.0
    %183 = vmatprep.subr.mxu0 0.0
    %184 = vmatpush1.msra.mxu0 0.0
    %185 = vmatprep.subr.mxu0 0.0
    %186 = vmatpush1.msra.mxu0 0.0
    %187 = vmatprep.subr.mxu0 0.0
    %188 = vmatpush1.msra.mxu0 0.0
    %189 = vmatprep.subr.mxu0 0.0
    %190 = vmatpush1.msra.mxu0 0.0
    %191 = vmatprep.subr.mxu0 0.0
    %192 = vmatpush1.msra.mxu0 0.0
    %193 = vmatprep.subr.mxu0 0.0
    %194 = vmatpush1.msra.mxu0 0.0
    %195 = vmatprep.subr.mxu0 0.0
    %196 = vmatpush1.msra.mxu0 0.0
    %197 = vmatprep.subr.mxu0 0.0
    %198 = vmatpush1.msra.mxu0 0.0
    %199 = vmatprep.subr.mxu0 0.0
    %200 = vmatpush1.msra.mxu0 0.0
    %201 = vmatprep.subr.mxu0 0.0
    %202 = vmatpush1.msra.mxu0 0.0
    %203 = vmatprep.subr.mxu0 0.0
    %204 = vmatpush1.msra.mxu0 0.0
    %205 = vmatprep.subr.mxu0 0.0
    %206 = vmatpush1.msra.mxu0 0.0
    %207 = vmatprep.subr.mxu0 0.0
    %208 = vmatpush1.msra.mxu0 0.0
    %209 = vmatprep.subr.mxu0 0.0
    %210 = vmatpush1.msra.mxu0 0.0
    %211 = vmatprep.subr.mxu0 0.0
    %212 = vmatpush1.msra.mxu0 0.0
    %213 = vmatprep.subr.mxu0 0.0
    %214 = vmatpush1.msra.mxu0 0.0
    %215 = vmatprep.subr.mxu0 0.0
    %216 = vmatpush1.msra.mxu0 0.0
    %217 = vmatprep.subr.mxu0 0.0
    %218 = vmatpush1.msra.mxu0 0.0
    %219 = vmatprep.subr.mxu0 0.0
    %220 = vmatpush1.msra.mxu0 0.0
    %221 = vmatprep.subr.mxu0 0.0
    %222 = vmatpush1.msra.mxu0 0.0
    %223 = vmatprep.subr.mxu0 0.0
    %224 = vmatpush1.msra.mxu0 0.0
    %225 = vmatprep.subr.mxu0 0.0
    %226 = vmatpush1.msra.mxu0 0.0
    %227 = vmatprep.subr.mxu0 0.0
    %228 = vmatpush1.msra.mxu0 0.0
    %229 = vmatprep.subr.mxu0 0.0
    %230 = vmatpush1.msra.mxu0 0.0
    %231 = vmatprep.subr.mxu0 0.0
    %232 = vmatpush1.msra.mxu0 0.0
    %233 = vmatprep.subr.mxu0 0.0
    %234 = vmatpush1.msra.mxu0 0.0
    %235 = vmatprep.subr.mxu0 0.0
    %236 = vmatpush1.msra.mxu0 0.0
    %237 = vmatprep.mubr.f32.mxu0 0.0
    %238 = vmatmul.mubr.f32.gmra.mrb[0].mxu0 %v168
    %v239 = vpop.f32.mrb[0].mxu0
    %v240 = vadd.f32 0.0, %v239
    %v241 = vpop.f32.mrb[0].mxu0
    %242 = vmatprep.mubr.f32.mxu0 0.0
    %243 = vmatmul.mubr.f32.gmra.mrb[0].mxu0 %v171
    %v244 = vpop.f32.mrb[0].mxu0
    %v245 = vadd.f32 0.0, %v244
    %v246 = vpop.f32.mrb[0].mxu0
    %247 = vdwg.mxu0
    %v248 = vmax.f32 %v240, 1e-08
    %v249 = vmax.f32 %v245, 1e-08
    %v250 = vrcp.pop %v248
    %v251 = vrcp.pop %v249
    %254 = vrot.lane.b32.xlu0 %v250, 96
    %v255 = vpop.permute.xlu0 %254
    %256 = vrot.lane.b32.xlu0 %v251, 96
    %v257 = vpop.permute.xlu0 %256
    %v260 = vmul.f32 %v240, %v255
    %v261 = vmul.f32 %v245, %v257
    %v262 = vpack.c.bf16 %v39, %v38
    %v263 = vld [vmem:[%s2] sm:$0xf]
    %v264 = vld [vmem:[%s2 + $0x4] sm:$0xf]
    %v265 = vld [vmem:[%s2 + $0x8] sm:$0xf]
    %v266 = vld [vmem:[%s2 + $0xc] sm:$0xf]
    %v271 = vunpack.c.l.b16 %v263
    %v272 = vunpack.c.l.b16 %v264
    %v273 = vunpack.c.l.b16 %v265
    %v274 = vunpack.c.l.b16 %v266
    %v275 = vpack.c.b16 %v272, %v271
    %v276 = vpack.c.b16 %v274, %v273
    %v280 = vsel %vm131, %v262, 0
    %282 = vmatprep.subr.bf16.mxu0 0
    %283 = vmatpush1.bf16.msra.mxu0 %v275
    %284 = vmatprep.subr.bf16.mxu0 0
    %285 = vmatpush1.bf16.msra.mxu0 %v276
    %286 = vmatprep.subr.bf16.mxu0 0
    %287 = vmatpush1.bf16.msra.mxu0 0
    %288 = vmatprep.subr.bf16.mxu0 0
    %289 = vmatpush1.bf16.msra.mxu0 0
    %290 = vmatprep.subr.bf16.mxu0 0
    %291 = vmatpush1.bf16.msra.mxu0 0
    %292 = vmatprep.subr.bf16.mxu0 0
    %293 = vmatpush1.bf16.msra.mxu0 0
    %294 = vmatprep.subr.bf16.mxu0 0
    %295 = vmatpush1.bf16.msra.mxu0 0
    %296 = vmatprep.subr.bf16.mxu0 0
    %297 = vmatpush1.bf16.msra.mxu0 0
    %298 = vmatprep.subr.bf16.mxu0 0
    %299 = vmatpush1.bf16.msra.mxu0 0
    %300 = vmatprep.subr.bf16.mxu0 0
    %301 = vmatpush1.bf16.msra.mxu0 0
    %302 = vmatprep.subr.bf16.mxu0 0
    %303 = vmatpush1.bf16.msra.mxu0 0
    %304 = vmatprep.subr.bf16.mxu0 0
    %305 = vmatpush1.bf16.msra.mxu0 0
    %306 = vmatprep.subr.bf16.mxu0 0
    %307 = vmatpush1.bf16.msra.mxu0 0
    %308 = vmatprep.subr.bf16.mxu0 0
    %309 = vmatpush1.bf16.msra.mxu0 0
    %310 = vmatprep.subr.bf16.mxu0 0
    %311 = vmatpush1.bf16.msra.mxu0 0
    %312 = vmatprep.subr.bf16.mxu0 0
    %313 = vmatpush1.bf16.msra.mxu0 0
    %314 = vmatprep.mubr.bf16.mxu0 0
    %315 = vmatmul.mubr.bf16.gmra.mrb[0].mxu0 %v280
    %v316 = vpop.f32.mrb[0].mxu0
    %v317 = vadd.f32 0.0, %v316
    %v318 = vpop.f32.mrb[0].mxu0
    %v319 = vpop.f32.mrb[0].mxu0
    %v320 = vadd.f32 0.0, %v319
    %v321 = vpop.f32.mrb[0].mxu0
    %322 = vdwg.mxu0
    %v323 = vadd.f32 %v317, %v260
    %v324 = vadd.f32 %v320, %v261
    %327 = vrot.lane.b32.xlu0 %v260, 32
    %v328 = vpop.permute.xlu0 %327
    %329 = vrot.lane.b32.xlu0 %v261, 32
    %v330 = vpop.permute.xlu0 %329
    %v333 = vadd.f32 %v317, %v328
    %v334 = vadd.f32 %v320, %v330
    %337 = vrot.lane.b32.xlu0 %v333, 96
    %v338 = vpop.permute.xlu0 %337
    %339 = vrot.lane.b32.xlu0 %v334, 96
    %v340 = vpop.permute.xlu0 %339
    %v343 = vmul.f32 %v323, %v323
    %v344 = vmul.f32 %v324, %v324
    %v345 = vmul.f32 %v338, %v338
    %v346 = vmul.f32 %v340, %v340
    %349 = vrot.lane.b32.xlu0 %v323, 32
    %v350 = vpop.permute.xlu0 %349
    %351 = vrot.lane.b32.xlu0 %v324, 32
    %v352 = vpop.permute.xlu0 %351
    %353 = vrot.lane.b32.xlu0 %v338, 32
    %v354 = vpop.permute.xlu0 %353
    %355 = vrot.lane.b32.xlu0 %v340, 32
    %v356 = vpop.permute.xlu0 %355
    %v361 = vsel %vm131, %v343, %v350
    %v362 = vsel %vm131, %v344, %v352
    %v363 = vsel %vm131, %v345, %v354
    %v364 = vsel %vm131, %v346, %v356
    %v365 = vld [vmem:[%s4] sm:$0xff]
    %v366 = vld [vmem:[%s4 + $0x8] sm:$0xff]
    %v367 = vld [vmem:[%s4 + $0x10] sm:$0xff]
    %v368 = vld [vmem:[%s4 + $0x18] sm:$0xff]
    %v369 = vld [vmem:[%s4 + $0x20] sm:$0xff]
    %v370 = vld [vmem:[%s4 + $0x28] sm:$0xff]
    %v371 = vld [vmem:[%s4 + $0x30] sm:$0xff]
    %v372 = vld [vmem:[%s4 + $0x38] sm:$0xff]
    %vm373 = vcmask 523264
    %v375 = vsel %vm373, %v361, 0
    %v378 = vsel %vm373, %v362, 0
    %v381 = vsel %vm373, %v363, 0
    %v384 = vsel %vm373, %v364, 0
    %386 = vmatprep.subr.mxu0 0.0
    %387 = vmatpush1.msra.mxu0 %v365
    %388 = vmatprep.subr.mxu0 0.0
    %389 = vmatpush1.msra.mxu0 %v366
    %390 = vmatprep.subr.mxu0 0.0
    %391 = vmatpush1.msra.mxu0 %v367
    %392 = vmatprep.subr.mxu0 0.0
    %393 = vmatpush1.msra.mxu0 %v368
    %394 = vmatprep.subr.mxu0 0.0
    %395 = vmatpush1.msra.mxu0 %v369
    %396 = vmatprep.subr.mxu0 0.0
    %397 = vmatpush1.msra.mxu0 %v370
    %398 = vmatprep.subr.mxu0 0.0
    %399 = vmatpush1.msra.mxu0 %v371
    %400 = vmatprep.subr.mxu0 0.0
    %401 = vmatpush1.msra.mxu0 %v372
    %402 = vmatprep.subr.mxu0 0.0
    %403 = vmatpush1.msra.mxu0 0.0
    %404 = vmatprep.subr.mxu0 0.0
    %405 = vmatpush1.msra.mxu0 0.0
    %406 = vmatprep.subr.mxu0 0.0
    %407 = vmatpush1.msra.mxu0 0.0
    %408 = vmatprep.subr.mxu0 0.0
    %409 = vmatpush1.msra.mxu0 0.0
    %410 = vmatprep.subr.mxu0 0.0
    %411 = vmatpush1.msra.mxu0 0.0
    %412 = vmatprep.subr.mxu0 0.0
    %413 = vmatpush1.msra.mxu0 0.0
    %414 = vmatprep.subr.mxu0 0.0
    %415 = vmatpush1.msra.mxu0 0.0
    %416 = vmatprep.subr.mxu0 0.0
    %417 = vmatpush1.msra.mxu0 0.0
    %418 = vmatprep.subr.mxu0 0.0
    %419 = vmatpush1.msra.mxu0 0.0
    %420 = vmatprep.subr.mxu0 0.0
    %421 = vmatpush1.msra.mxu0 0.0
    %422 = vmatprep.subr.mxu0 0.0
    %423 = vmatpush1.msra.mxu0 0.0
    %424 = vmatprep.subr.mxu0 0.0
    %425 = vmatpush1.msra.mxu0 0.0
    %426 = vmatprep.subr.mxu0 0.0
    %427 = vmatpush1.msra.mxu0 0.0
    %428 = vmatprep.subr.mxu0 0.0
    %429 = vmatpush1.msra.mxu0 0.0
    %430 = vmatprep.subr.mxu0 0.0
    %431 = vmatpush1.msra.mxu0 0.0
    %432 = vmatprep.subr.mxu0 0.0
    %433 = vmatpush1.msra.mxu0 0.0
    %434 = vmatprep.subr.mxu0 0.0
    %435 = vmatpush1.msra.mxu0 0.0
    %436 = vmatprep.subr.mxu0 0.0
    %437 = vmatpush1.msra.mxu0 0.0
    %438 = vmatprep.subr.mxu0 0.0
    %439 = vmatpush1.msra.mxu0 0.0
    %440 = vmatprep.subr.mxu0 0.0
    %441 = vmatpush1.msra.mxu0 0.0
    %442 = vmatprep.subr.mxu0 0.0
    %443 = vmatpush1.msra.mxu0 0.0
    %444 = vmatprep.subr.mxu0 0.0
    %445 = vmatpush1.msra.mxu0 0.0
    %446 = vmatprep.subr.mxu0 0.0
    %447 = vmatpush1.msra.mxu0 0.0
    %448 = vmatprep.subr.mxu0 0.0
    %449 = vmatpush1.msra.mxu0 0.0
    %450 = vmatprep.mubr.f32.mxu0 0.0
    %451 = vmatmul.mubr.f32.gmra.mrb[0].mxu0 %v375
    %v452 = vpop.f32.mrb[0].mxu0
    %v453 = vadd.f32 0.0, %v452
    %v454 = vpop.f32.mrb[0].mxu0
    %455 = vmatprep.mubr.f32.mxu0 0.0
    %456 = vmatmul.mubr.f32.gmra.mrb[0].mxu0 %v378
    %v457 = vpop.f32.mrb[0].mxu0
    %v458 = vadd.f32 0.0, %v457
    %v459 = vpop.f32.mrb[0].mxu0
    %460 = vmatprep.mubr.f32.mxu0 0.0
    %461 = vmatmul.mubr.f32.gmra.mrb[0].mxu0 %v381
    %v462 = vpop.f32.mrb[0].mxu0
    %v463 = vadd.f32 0.0, %v462
    %v464 = vpop.f32.mrb[0].mxu0
    %465 = vmatprep.mubr.f32.mxu0 0.0
    %466 = vmatmul.mubr.f32.gmra.mrb[0].mxu0 %v384
    %v467 = vpop.f32.mrb[0].mxu0
    %v468 = vadd.f32 0.0, %v467
    %v469 = vpop.f32.mrb[0].mxu0
    %470 = vdwg.mxu0
    %v471 = vmul.f32 %v453, 2.0
    %v472 = vmul.f32 %v458, 2.0
    %v473 = vmul.f32 %v463, 2.0
    %v474 = vmul.f32 %v468, 2.0
    %479 = vrot.lane.b32.xlu0 %v471, 112
    %v480 = vpop.permute.xlu0 %479
    %481 = vrot.lane.b32.xlu0 %v472, 112
    %v482 = vpop.permute.xlu0 %481
    %483 = vrot.lane.b32.xlu0 %v473, 112
    %v484 = vpop.permute.xlu0 %483
    %485 = vrot.lane.b32.xlu0 %v474, 112
    %v486 = vpop.permute.xlu0 %485
    %v491 = vsub.f32 %v453, %v480
    %v492 = vsub.f32 %v458, %v482
    %v493 = vsub.f32 %v463, %v484
    %v494 = vsub.f32 %v468, %v486
    %v495 = vlaneseq
    %v496 = vshrl.u32 %v495, 7
    %v497 = vsub.s32 0, %v496
    %v498 = vrot.slane %v40, %v497
    %v499 = vadd.f32 %v491, %v498
    %v500 = vadd.f32 %v492, %v498
    %v501 = vadd.f32 %v493, %v498
    %v502 = vadd.f32 %v494, %v498
    %v503 = vlaneseq
    %v504 = vshrl.u32 %v503, 7
    %v505 = vsub.s32 1, %v504
    %v506 = vrot.slane %v40, %v505
    %v507 = vmul.f32 %v506, %v499
    %v508 = vmul.f32 %v506, %v500
    %v509 = vmul.f32 %v506, %v501
    %v510 = vmul.f32 %v506, %v502
    %v511 = vmul.f32 %v507, 1.442695
    %v512 = vpow.pop %v511
    %v513 = vmul.f32 %v508, 1.442695
    %v514 = vpow.pop %v513
    %v515 = vmul.f32 %v509, 1.442695
    %v516 = vpow.pop %v515
    %v517 = vmul.f32 %v510, 1.442695
    %v518 = vpow.pop %v517
    %v519 = vlaneseq
    %v520 = vshrl.u32 %v519, 7
    %v521 = vsub.s32 2, %v520
    %v522 = vrot.slane %v40, %v521
    %v523 = vmul.f32 %v522, %v512
    %v524 = vmul.f32 %v522, %v514
    %v525 = vmul.f32 %v522, %v516
    %v526 = vmul.f32 %v522, %v518
    %v527 = vld [vmem:[%s5] sm:$0xff]
    %v528 = vld [vmem:[%s5 + $0x8] sm:$0xff]
    %v529 = vld [vmem:[%s5 + $0x10] sm:$0xff]
    %v530 = vld [vmem:[%s5 + $0x18] sm:$0xff]
    %v531 = vld [vmem:[%s5 + $0x20] sm:$0xff]
    %v532 = vld [vmem:[%s5 + $0x28] sm:$0xff]
    %v533 = vld [vmem:[%s5 + $0x30] sm:$0xff]
    %v534 = vld [vmem:[%s5 + $0x38] sm:$0xff]
    %v535 = vld [vmem:[%s5 + $0x40] sm:$0xff]
    %v536 = vld [vmem:[%s5 + $0x48] sm:$0xff]
    %v537 = vld [vmem:[%s5 + $0x50] sm:$0xff]
    %v538 = vld [vmem:[%s5 + $0x58] sm:$0xff]
    %v539 = vld [vmem:[%s5 + $0x60] sm:$0xff]
    %v540 = vld [vmem:[%s5 + $0x68] sm:$0xff]
    %v541 = vld [vmem:[%s5 + $0x70] sm:$0xff]
    %v542 = vld [vmem:[%s5 + $0x78] sm:$0xff]
    %v543 = vld [vmem:[%s5 + $0x80] sm:$0xff]
    %v544 = vld [vmem:[%s5 + $0x88] sm:$0xff]
    %v545 = vmul.f32 %v525, %v537
    %v546 = vmul.f32 %v526, %v538
    %v547 = vmul.f32 %v525, %v539
    %v548 = vmul.f32 %v526, %v540
    %v549 = vmul.f32 %v525, %v541
    %v550 = vmul.f32 %v526, %v542
    %v551 = vmul.f32 %v525, %v543
    %v552 = vmul.f32 %v526, %v544
    %v554 = vsel %vm47, %v523, 0
    %v557 = vsel %vm47, %v524, 0
    %v560 = vsel %vm47, %v545, 0
    %v563 = vsel %vm47, %v546, 0
    %v566 = vsel %vm47, %v547, 0
    %v569 = vsel %vm47, %v548, 0
    %v572 = vsel %vm47, %v549, 0
    %v575 = vsel %vm47, %v550, 0
    %v578 = vsel %vm47, %v551, 0
    %v581 = vsel %vm47, %v552, 0
    %583 = vmatprep.subr.mxu0 0.0
    %584 = vmatpush1.xpose.msra.mxu0 %v560
    %585 = vmatprep.subr.mxu0 0.0
    %586 = vmatpush1.xpose.msra.mxu0 %v563
    %587 = vmatprep.subr.mxu0 0.0
    %588 = vmatpush1.xpose.msra.mxu0 %v566
    %589 = vmatprep.subr.mxu0 0.0
    %590 = vmatpush1.xpose.msra.mxu0 %v569
    %591 = vmatprep.subr.mxu0 0.0
    %592 = vmatpush1.xpose.msra.mxu0 %v572
    %593 = vmatprep.subr.mxu0 0.0
    %594 = vmatpush1.xpose.msra.mxu0 %v575
    %595 = vmatprep.subr.mxu0 0.0
    %596 = vmatpush1.xpose.msra.mxu0 %v578
    %597 = vmatprep.subr.mxu0 0.0
    %598 = vmatpush1.xpose.msra.mxu0 %v581
    %599 = vmatprep.subr.mxu0 0.0
    %600 = vmatpush1.xpose.msra.mxu0 0.0
    %601 = vmatprep.subr.mxu0 0.0
    %602 = vmatpush1.xpose.msra.mxu0 0.0
    %603 = vmatprep.subr.mxu0 0.0
    %604 = vmatpush1.xpose.msra.mxu0 0.0
    %605 = vmatprep.subr.mxu0 0.0
    %606 = vmatpush1.xpose.msra.mxu0 0.0
    %607 = vmatprep.subr.mxu0 0.0
    %608 = vmatpush1.xpose.msra.mxu0 0.0
    %609 = vmatprep.subr.mxu0 0.0
    %610 = vmatpush1.xpose.msra.mxu0 0.0
    %611 = vmatprep.subr.mxu0 0.0
    %612 = vmatpush1.xpose.msra.mxu0 0.0
    %613 = vmatprep.subr.mxu0 0.0
    %614 = vmatpush1.xpose.msra.mxu0 0.0
    %615 = vmatprep.subr.mxu0 0.0
    %616 = vmatpush1.xpose.msra.mxu0 0.0
    %617 = vmatprep.subr.mxu0 0.0
    %618 = vmatpush1.xpose.msra.mxu0 0.0
    %619 = vmatprep.subr.mxu0 0.0
    %620 = vmatpush1.xpose.msra.mxu0 0.0
    %621 = vmatprep.subr.mxu0 0.0
    %622 = vmatpush1.xpose.msra.mxu0 0.0
    %623 = vmatprep.subr.mxu0 0.0
    %624 = vmatpush1.xpose.msra.mxu0 0.0
    %625 = vmatprep.subr.mxu0 0.0
    %626 = vmatpush1.xpose.msra.mxu0 0.0
    %627 = vmatprep.subr.mxu0 0.0
    %628 = vmatpush1.xpose.msra.mxu0 0.0
    %629 = vmatprep.subr.mxu0 0.0
    %630 = vmatpush1.xpose.msra.mxu0 0.0
    %631 = vmatprep.subr.mxu0 0.0
    %632 = vmatpush1.xpose.msra.mxu0 0.0
    %633 = vmatprep.subr.mxu0 0.0
    %634 = vmatpush1.xpose.msra.mxu0 0.0
    %635 = vmatprep.subr.mxu0 0.0
    %636 = vmatpush1.xpose.msra.mxu0 0.0
    %637 = vmatprep.subr.mxu0 0.0
    %638 = vmatpush1.xpose.msra.mxu0 0.0
    %639 = vmatprep.subr.mxu0 0.0
    %640 = vmatpush1.xpose.msra.mxu0 0.0
    %641 = vmatprep.subr.mxu0 0.0
    %642 = vmatpush1.xpose.msra.mxu0 0.0
    %643 = vmatprep.subr.mxu0 0.0
    %644 = vmatpush1.xpose.msra.mxu0 0.0
    %645 = vmatprep.subr.mxu0 0.0
    %646 = vmatpush1.xpose.msra.mxu0 0.0
    %647 = vmatprep.mubr.f32.mxu0 0.0
    %648 = vmatmul.mubr.f32.gmra.mrb[0].mxu0 %v554
    %v649 = vpop.f32.mrb[0].mxu0
    %v650 = vadd.f32 0.0, %v649
    %v651 = vpop.f32.mrb[0].mxu0
    %652 = vmatprep.mubr.f32.mxu0 0.0
    %653 = vmatmul.mubr.f32.gmra.mrb[0].mxu0 %v557
    %v654 = vpop.f32.mrb[0].mxu0
    %v655 = vadd.f32 0.0, %v654
    %v656 = vpop.f32.mrb[0].mxu0
    %657 = vdwg.mxu0
    %v658 = vmul.f32 %v650, 1.442695
    %v659 = vpow.pop %v658
    %v660 = vmul.f32 %v655, 1.442695
    %v661 = vpow.pop %v660
    %v662 = vmul.f32 %v659, %v527
    %v663 = vmul.f32 %v661, %v528
    %666 = vrot.lane.b32.xlu0 %v317, 64
    %v667 = vpop.permute.xlu0 %666
    %668 = vrot.lane.b32.xlu0 %v320, 64
    %v669 = vpop.permute.xlu0 %668
    %v672 = vsel %vm131, %v667, 1.0
    %v673 = vsel %vm131, %v669, 1.0
    %v674 = vmul.f32 %v672, %v529
    %v675 = vmul.f32 %v673, %v530
    %v676 = vmul.f32 %v672, %v531
    %v677 = vmul.f32 %v673, %v532
    %v678 = vmul.f32 %v672, %v533
    %v679 = vmul.f32 %v673, %v534
    %v680 = vmul.f32 %v672, %v535
    %v681 = vmul.f32 %v673, %v536
    %v683 = vsel %vm373, %v662, 0
    %v686 = vsel %vm373, %v663, 0
    %688 = vmatprep.subr.mxu0 0.0
    %689 = vmatpush1.msra.mxu0 %v674
    %690 = vmatprep.subr.mxu0 0.0
    %691 = vmatpush1.msra.mxu0 %v675
    %692 = vmatprep.subr.mxu0 0.0
    %693 = vmatpush1.msra.mxu0 %v676
    %694 = vmatprep.subr.mxu0 0.0
    %695 = vmatpush1.msra.mxu0 %v677
    %696 = vmatprep.subr.mxu0 0.0
    %697 = vmatpush1.msra.mxu0 %v678
    %698 = vmatprep.subr.mxu0 0.0
    %699 = vmatpush1.msra.mxu0 %v679
    %700 = vmatprep.subr.mxu0 0.0
    %701 = vmatpush1.msra.mxu0 %v680
    %702 = vmatprep.subr.mxu0 0.0
    %703 = vmatpush1.msra.mxu0 %v681
    %704 = vmatprep.subr.mxu0 0.0
    %705 = vmatpush1.msra.mxu0 0.0
    %706 = vmatprep.subr.mxu0 0.0
    %707 = vmatpush1.msra.mxu0 0.0
    %708 = vmatprep.subr.mxu0 0.0
    %709 = vmatpush1.msra.mxu0 0.0
    %710 = vmatprep.subr.mxu0 0.0
    %711 = vmatpush1.msra.mxu0 0.0
    %712 = vmatprep.subr.mxu0 0.0
    %713 = vmatpush1.msra.mxu0 0.0
    %714 = vmatprep.subr.mxu0 0.0
    %715 = vmatpush1.msra.mxu0 0.0
    %716 = vmatprep.subr.mxu0 0.0
    %717 = vmatpush1.msra.mxu0 0.0
    %718 = vmatprep.subr.mxu0 0.0
    %719 = vmatpush1.msra.mxu0 0.0
    %720 = vmatprep.subr.mxu0 0.0
    %721 = vmatpush1.msra.mxu0 0.0
    %722 = vmatprep.subr.mxu0 0.0
    %723 = vmatpush1.msra.mxu0 0.0
    %724 = vmatprep.subr.mxu0 0.0
    %725 = vmatpush1.msra.mxu0 0.0
    %726 = vmatprep.subr.mxu0 0.0
    %727 = vmatpush1.msra.mxu0 0.0
    %728 = vmatprep.subr.mxu0 0.0
    %729 = vmatpush1.msra.mxu0 0.0
    %730 = vmatprep.subr.mxu0 0.0
    %731 = vmatpush1.msra.mxu0 0.0
    %732 = vmatprep.subr.mxu0 0.0
    %733 = vmatpush1.msra.mxu0 0.0
    %734 = vmatprep.subr.mxu0 0.0
    %735 = vmatpush1.msra.mxu0 0.0
    %736 = vmatprep.subr.mxu0 0.0
    %737 = vmatpush1.msra.mxu0 0.0
    %738 = vmatprep.subr.mxu0 0.0
    %739 = vmatpush1.msra.mxu0 0.0
    %740 = vmatprep.subr.mxu0 0.0
    %741 = vmatpush1.msra.mxu0 0.0
    %742 = vmatprep.subr.mxu0 0.0
    %743 = vmatpush1.msra.mxu0 0.0
    %744 = vmatprep.subr.mxu0 0.0
    %745 = vmatpush1.msra.mxu0 0.0
    %746 = vmatprep.subr.mxu0 0.0
    %747 = vmatpush1.msra.mxu0 0.0
    %748 = vmatprep.subr.mxu0 0.0
    %749 = vmatpush1.msra.mxu0 0.0
    %750 = vmatprep.subr.mxu0 0.0
    %751 = vmatpush1.msra.mxu0 0.0
    %752 = vmatprep.mubr.f32.mxu0 0.0
    %753 = vmatmul.mubr.f32.gmra.mrb[0].mxu0 %v683
    %v754 = vpop.f32.mrb[0].mxu0
    %v755 = vadd.f32 0.0, %v754
    %v756 = vpop.f32.mrb[0].mxu0
    %757 = vmatprep.mubr.f32.mxu0 0.0
    %758 = vmatmul.mubr.f32.gmra.mrb[0].mxu0 %v686
    %v759 = vpop.f32.mrb[0].mxu0
    %v760 = vadd.f32 0.0, %v759
    %v761 = vpop.f32.mrb[0].mxu0
    %762 = vdwg.mxu0
    %v763 = vrcp.pop %v755
    %v764 = vrcp.pop %v760
    %767 = vrot.lane.b32.xlu0 %v763, 96
    %v768 = vpop.permute.xlu0 %767
    %769 = vrot.lane.b32.xlu0 %v764, 96
    %v770 = vpop.permute.xlu0 %769
    %v773 = vmul.f32 %v755, %v768
    %v774 = vmul.f32 %v760, %v770
    %v775 = vpack.c.bf16 %v774, %v773
    %v776 = vld [vmem:[%s3] sm:$0xf]
    %v777 = vld [vmem:[%s3 + $0x4] sm:$0xf]
    %v778 = vld [vmem:[%s3 + $0x8] sm:$0xf]
    %v779 = vld [vmem:[%s3 + $0xc] sm:$0xf]
    %v784 = vunpack.c.l.b16 %v776
    %v785 = vunpack.c.l.b16 %v777
    %v786 = vunpack.c.l.b16 %v778
    %v787 = vunpack.c.l.b16 %v779
    %v788 = vpack.c.b16 %v785, %v784
    %v789 = vpack.c.b16 %v787, %v786
    %v793 = vsel %vm131, %v775, 0
    %795 = vmatprep.subr.bf16.mxu0 0
    %796 = vmatpush1.bf16.msra.mxu0 %v788
    %797 = vmatprep.subr.bf16.mxu0 0
    %798 = vmatpush1.bf16.msra.mxu0 %v789
    %799 = vmatprep.subr.bf16.mxu0 0
    %800 = vmatpush1.bf16.msra.mxu0 0
    %801 = vmatprep.subr.bf16.mxu0 0
    %802 = vmatpush1.bf16.msra.mxu0 0
    %803 = vmatprep.subr.bf16.mxu0 0
    %804 = vmatpush1.bf16.msra.mxu0 0
    %805 = vmatprep.subr.bf16.mxu0 0
    %806 = vmatpush1.bf16.msra.mxu0 0
    %807 = vmatprep.subr.bf16.mxu0 0
    %808 = vmatpush1.bf16.msra.mxu0 0
    %809 = vmatprep.subr.bf16.mxu0 0
    %810 = vmatpush1.bf16.msra.mxu0 0
    %811 = vmatprep.subr.bf16.mxu0 0
    %812 = vmatpush1.bf16.msra.mxu0 0
    %813 = vmatprep.subr.bf16.mxu0 0
    %814 = vmatpush1.bf16.msra.mxu0 0
    %815 = vmatprep.subr.bf16.mxu0 0
    %816 = vmatpush1.bf16.msra.mxu0 0
    %817 = vmatprep.subr.bf16.mxu0 0
    %818 = vmatpush1.bf16.msra.mxu0 0
    %819 = vmatprep.subr.bf16.mxu0 0
    %820 = vmatpush1.bf16.msra.mxu0 0
    %821 = vmatprep.subr.bf16.mxu0 0
    %822 = vmatpush1.bf16.msra.mxu0 0
    %823 = vmatprep.subr.bf16.mxu0 0
    %824 = vmatpush1.bf16.msra.mxu0 0
    %825 = vmatprep.subr.bf16.mxu0 0
    %826 = vmatpush1.bf16.msra.mxu0 0
    %827 = vmatprep.mubr.bf16.mxu0 0
    %828 = vmatmul.mubr.bf16.gmra.mrb[0].mxu0 %v793
    %v829 = vpop.f32.mrb[0].mxu0
    %v830 = vadd.f32 0.0, %v829
    %v831 = vpop.f32.mrb[0].mxu0
    %v832 = vpop.f32.mrb[0].mxu0
    %v833 = vadd.f32 0.0, %v832
    %v834 = vpop.f32.mrb[0].mxu0
    %835 = vdwg.mxu0
    %v836 = vadd.f32 %v38, %v830
    %v837 = vadd.f32 %v39, %v833
    %v838 = vsel %vm131, %v836, 0.0
    %839 = vadd.xlane.f32.xlu0 %v838
    %v840 = vpop.xlane.xlu0 %839
    %v841 = vsel %vm131, %v837, 0.0
    %842 = vadd.xlane.f32.xlu0 %v841
    %v843 = vpop.xlane.xlu0 %842
    %v844 = vrcp.pop 32.0
    %v845 = vmul.f32 %v840, %v844
    %v846 = vmul.f32 %v843, %v844
    %v847 = vsub.f32 %v836, %v845
    %v848 = vsub.f32 %v837, %v846
    %v849 = vmul.f32 %v847, %v847
    %v850 = vmul.f32 %v848, %v848
    %v851 = vsel %vm131, %v849, 0.0
    %852 = vadd.xlane.f32.xlu0 %v851
    %v853 = vpop.xlane.xlu0 %852
    %v854 = vsel %vm131, %v850, 0.0
    %855 = vadd.xlane.f32.xlu0 %v854
    %v856 = vpop.xlane.xlu0 %855
    %v857 = vmul.f32 %v853, %v844
    %v858 = vmul.f32 %v856, %v844
    %v859 = vadd.f32 %v857, 1e-05
    %v860 = vadd.f32 %v858, 1e-05
    %v861 = vrsqrt.pop %v859
    %v862 = vrsqrt.pop %v860
    %v863 = vmul.f32 %v847, %v861
    %v864 = vmul.f32 %v848, %v862
    %v865 = vlaneseq
    %v866 = vshrl.u32 %v865, 7
    %v867 = vsub.s32 3, %v866
    %v868 = vrot.slane %v40, %v867
    %v869 = vmul.f32 %v863, %v868
    %v870 = vmul.f32 %v864, %v868
    %v871 = vlaneseq
    %v872 = vshrl.u32 %v871, 7
    %v873 = vsub.s32 4, %v872
    %v874 = vrot.slane %v40, %v873
    %v875 = vadd.f32 %v869, %v874
    %v876 = vadd.f32 %v870, %v874
    %v877 = vpack.c.bf16 %v876, %v875
    %v878 = vld [vmem:[%s6] sm:$0xf]
    %v879 = vld [vmem:[%s6 + $0x4] sm:$0xf]
    %v880 = vld [vmem:[%s6 + $0x8] sm:$0xf]
    %v881 = vld [vmem:[%s6 + $0xc] sm:$0xf]
    %v882 = vlaneseq
    %v883 = vshrl.u32 %v882, 7
    %v884 = vsub.s32 0, %v883
    %v885 = vrot.slane %v41, %v884
    %v890 = vunpack.c.l.b16 %v878
    %v891 = vunpack.c.l.b16 %v879
    %v892 = vunpack.c.l.b16 %v880
    %v893 = vunpack.c.l.b16 %v881
    %v894 = vpack.c.b16 %v891, %v890
    %v895 = vpack.c.b16 %v893, %v892
    %v899 = vsel %vm131, %v877, 0
    %901 = vmatprep.subr.bf16.mxu0 0
    %902 = vmatpush1.bf16.msra.mxu0 %v894
    %903 = vmatprep.subr.bf16.mxu0 0
    %904 = vmatpush1.bf16.msra.mxu0 %v895
    %905 = vmatprep.subr.bf16.mxu0 0
    %906 = vmatpush1.bf16.msra.mxu0 0
    %907 = vmatprep.subr.bf16.mxu0 0
    %908 = vmatpush1.bf16.msra.mxu0 0
    %909 = vmatprep.subr.bf16.mxu0 0
    %910 = vmatpush1.bf16.msra.mxu0 0
    %911 = vmatprep.subr.bf16.mxu0 0
    %912 = vmatpush1.bf16.msra.mxu0 0
    %913 = vmatprep.subr.bf16.mxu0 0
    %914 = vmatpush1.bf16.msra.mxu0 0
    %915 = vmatprep.subr.bf16.mxu0 0
    %916 = vmatpush1.bf16.msra.mxu0 0
    %917 = vmatprep.subr.bf16.mxu0 0
    %918 = vmatpush1.bf16.msra.mxu0 0
    %919 = vmatprep.subr.bf16.mxu0 0
    %920 = vmatpush1.bf16.msra.mxu0 0
    %921 = vmatprep.subr.bf16.mxu0 0
    %922 = vmatpush1.bf16.msra.mxu0 0
    %923 = vmatprep.subr.bf16.mxu0 0
    %924 = vmatpush1.bf16.msra.mxu0 0
    %925 = vmatprep.subr.bf16.mxu0 0
    %926 = vmatpush1.bf16.msra.mxu0 0
    %927 = vmatprep.subr.bf16.mxu0 0
    %928 = vmatpush1.bf16.msra.mxu0 0
    %929 = vmatprep.subr.bf16.mxu0 0
    %930 = vmatpush1.bf16.msra.mxu0 0
    %931 = vmatprep.subr.bf16.mxu0 0
    %932 = vmatpush1.bf16.msra.mxu0 0
    %933 = vmatprep.mubr.bf16.mxu0 0
    %934 = vmatmul.mubr.bf16.gmra.mrb[0].mxu0 %v899
    %v935 = vpop.f32.mrb[0].mxu0
    %v936 = vadd.f32 %v885, %v935
    %v937 = vpop.f32.mrb[0].mxu0
    %v938 = vpop.f32.mrb[0].mxu0
    %v939 = vadd.f32 %v885, %v938
    %v940 = vpop.f32.mrb[0].mxu0
    %941 = vdwg.mxu0
    %v942 = vmul.f32 %v936, 0.5
    %v943 = vmul.f32 %v939, 0.5
    %v944 = vmul.f32 %v936, 0.70710677
    %v945 = vmul.f32 %v939, 0.70710677
    %vm946 = vcmp.ge.f32.partialorder %v944, 0.0
    %vm947 = vcmp.ge.f32.partialorder %v945, 0.0
    %v948 = vsel %vm946, 1.0, -1.0
    %v949 = vsel %vm947, 1.0, -1.0
    %v950 = vand.u32 2147483647, %v944
    %v951 = vand.u32 2147483647, %v945
    %v952 = vmul.f32 %v950, 0.3275911
    %v953 = vmul.f32 %v951, 0.3275911
    %v954 = vadd.f32 %v952, 1.0
    %v955 = vadd.f32 %v953, 1.0
    %v956 = vrcp.pop %v954
    %v957 = vrcp.pop %v955
    %v958 = vmul.f32 %v956, 1.0614054
    %v959 = vmul.f32 %v957, 1.0614054
    %v960 = vadd.f32 %v958, -1.4531521
    %v961 = vadd.f32 %v959, -1.4531521
    %v962 = vmul.f32 %v960, %v956
    %v963 = vmul.f32 %v961, %v957
    %v964 = vadd.f32 %v962, 1.4214138
    %v965 = vadd.f32 %v963, 1.4214138
    %v966 = vmul.f32 %v964, %v956
    %v967 = vmul.f32 %v965, %v957
    %v968 = vadd.f32 %v966, -0.28449672
    %v969 = vadd.f32 %v967, -0.28449672
    %v970 = vmul.f32 %v968, %v956
    %v971 = vmul.f32 %v969, %v957
    %v972 = vadd.f32 %v970, 0.2548296
    %v973 = vadd.f32 %v971, 0.2548296
    %v974 = vmul.f32 %v972, %v956
    %v975 = vmul.f32 %v973, %v957
    %v976 = vsub.f32 0.0, %v950
    %v977 = vsub.f32 0.0, %v951
    %v978 = vmul.f32 %v976, %v950
    %v979 = vmul.f32 %v977, %v951
    %v980 = vmul.f32 %v978, 1.442695
    %v981 = vpow.pop %v980
    %v982 = vmul.f32 %v979, 1.442695
    %v983 = vpow.pop %v982
    %v984 = vmul.f32 %v974, %v981
    %v985 = vmul.f32 %v975, %v983
    %v986 = vsub.f32 1.0, %v984
    %v987 = vsub.f32 1.0, %v985
    %v988 = vmul.f32 %v948, %v986
    %v989 = vmul.f32 %v949, %v987
    %v990 = vadd.f32 %v988, 1.0
    %v991 = vadd.f32 %v989, 1.0
    %v992 = vmul.f32 %v942, %v990
    %v993 = vmul.f32 %v943, %v991
    %v994 = vpack.c.bf16 %v993, %v992
    %v995 = vld [vmem:[%s7] sm:$0xf]
    %v996 = vld [vmem:[%s7 + $0x4] sm:$0xf]
    %v997 = vld [vmem:[%s7 + $0x8] sm:$0xf]
    %v998 = vld [vmem:[%s7 + $0xc] sm:$0xf]
    %v999 = vld [vmem:[%s7 + $0x10] sm:$0xf]
    %v1000 = vld [vmem:[%s7 + $0x14] sm:$0xf]
    %v1001 = vld [vmem:[%s7 + $0x18] sm:$0xf]
    %v1002 = vld [vmem:[%s7 + $0x1c] sm:$0xf]
    %v1003 = vld [vmem:[%s7 + $0x20] sm:$0xf]
    %v1004 = vld [vmem:[%s7 + $0x24] sm:$0xf]
    %v1005 = vld [vmem:[%s7 + $0x28] sm:$0xf]
    %v1006 = vld [vmem:[%s7 + $0x2c] sm:$0xf]
    %v1007 = vld [vmem:[%s7 + $0x30] sm:$0xf]
    %v1008 = vld [vmem:[%s7 + $0x34] sm:$0xf]
    %v1009 = vld [vmem:[%s7 + $0x38] sm:$0xf]
    %v1010 = vld [vmem:[%s7 + $0x3c] sm:$0xf]
    %v1011 = vlaneseq
    %v1012 = vshrl.u32 %v1011, 7
    %v1013 = vsub.s32 5, %v1012
    %v1014 = vrot.slane %v40, %v1013
    %v1031 = vunpack.c.l.b16 %v995
    %v1032 = vunpack.c.l.b16 %v996
    %v1033 = vunpack.c.l.b16 %v997
    %v1034 = vunpack.c.l.b16 %v998
    %v1035 = vunpack.c.l.b16 %v999
    %v1036 = vunpack.c.l.b16 %v1000
    %v1037 = vunpack.c.l.b16 %v1001
    %v1038 = vunpack.c.l.b16 %v1002
    %v1039 = vunpack.c.l.b16 %v1003
    %v1040 = vunpack.c.l.b16 %v1004
    %v1041 = vunpack.c.l.b16 %v1005
    %v1042 = vunpack.c.l.b16 %v1006
    %v1043 = vunpack.c.l.b16 %v1007
    %v1044 = vunpack.c.l.b16 %v1008
    %v1045 = vunpack.c.l.b16 %v1009
    %v1046 = vunpack.c.l.b16 %v1010
    %v1047 = vpack.c.b16 %v1032, %v1031
    %v1048 = vpack.c.b16 %v1034, %v1033
    %v1049 = vpack.c.b16 %v1036, %v1035
    %v1050 = vpack.c.b16 %v1038, %v1037
    %v1051 = vpack.c.b16 %v1040, %v1039
    %v1052 = vpack.c.b16 %v1042, %v1041
    %v1053 = vpack.c.b16 %v1044, %v1043
    %v1054 = vpack.c.b16 %v1046, %v1045
    %1063 = vmatprep.subr.bf16.mxu0 0
    %1064 = vmatpush1.bf16.msra.mxu0 %v1047
    %1065 = vmatprep.subr.bf16.mxu0 0
    %1066 = vmatpush1.bf16.msra.mxu0 %v1048
    %1067 = vmatprep.subr.bf16.mxu0 0
    %1068 = vmatpush1.bf16.msra.mxu0 %v1049
    %1069 = vmatprep.subr.bf16.mxu0 0
    %1070 = vmatpush1.bf16.msra.mxu0 %v1050
    %1071 = vmatprep.subr.bf16.mxu0 0
    %1072 = vmatpush1.bf16.msra.mxu0 %v1051
    %1073 = vmatprep.subr.bf16.mxu0 0
    %1074 = vmatpush1.bf16.msra.mxu0 %v1052
    %1075 = vmatprep.subr.bf16.mxu0 0
    %1076 = vmatpush1.bf16.msra.mxu0 %v1053
    %1077 = vmatprep.subr.bf16.mxu0 0
    %1078 = vmatpush1.bf16.msra.mxu0 %v1054
    %1079 = vmatprep.subr.bf16.mxu0 0
    %1080 = vmatpush1.bf16.msra.mxu0 0
    %1081 = vmatprep.subr.bf16.mxu0 0
    %1082 = vmatpush1.bf16.msra.mxu0 0
    %1083 = vmatprep.subr.bf16.mxu0 0
    %1084 = vmatpush1.bf16.msra.mxu0 0
    %1085 = vmatprep.subr.bf16.mxu0 0
    %1086 = vmatpush1.bf16.msra.mxu0 0
    %1087 = vmatprep.subr.bf16.mxu0 0
    %1088 = vmatpush1.bf16.msra.mxu0 0
    %1089 = vmatprep.subr.bf16.mxu0 0
    %1090 = vmatpush1.bf16.msra.mxu0 0
    %1091 = vmatprep.subr.bf16.mxu0 0
    %1092 = vmatpush1.bf16.msra.mxu0 0
    %1093 = vmatprep.subr.bf16.mxu0 0
    %1094 = vmatpush1.bf16.msra.mxu0 0
    %1095 = vmatprep.mubr.bf16.mxu0 0
    %1096 = vmatmul.mubr.bf16.gmra.mrb[0].mxu0 %v994
    %v1097 = vpop.f32.mrb[0].mxu0
    %v1098 = vadd.f32 %v1014, %v1097
    %v1099 = vpop.f32.mrb[0].mxu0
    %v1100 = vpop.f32.mrb[0].mxu0
    %v1101 = vadd.f32 %v1014, %v1100
    %v1102 = vpop.f32.mrb[0].mxu0
    %1103 = vdwg.mxu0
    %v1104 = vadd.f32 %v875, %v1098
    %v1105 = vadd.f32 %v876, %v1101
    %v1106 = vsel %vm131, %v1104, 0.0
    %1107 = vadd.xlane.f32.xlu0 %v1106
    %v1108 = vpop.xlane.xlu0 %1107
    %v1109 = vsel %vm131, %v1105, 0.0
    %1110 = vadd.xlane.f32.xlu0 %v1109
    %v1111 = vpop.xlane.xlu0 %1110
    %v1112 = vmul.f32 %v1108, %v844
    %v1113 = vmul.f32 %v1111, %v844
    %v1114 = vsub.f32 %v1104, %v1112
    %v1115 = vsub.f32 %v1105, %v1113
    %v1116 = vmul.f32 %v1114, %v1114
    %v1117 = vmul.f32 %v1115, %v1115
    %v1118 = vsel %vm131, %v1116, 0.0
    %1119 = vadd.xlane.f32.xlu0 %v1118
    %v1120 = vpop.xlane.xlu0 %1119
    %v1121 = vsel %vm131, %v1117, 0.0
    %1122 = vadd.xlane.f32.xlu0 %v1121
    %v1123 = vpop.xlane.xlu0 %1122
    %v1124 = vmul.f32 %v1120, %v844
    %v1125 = vmul.f32 %v1123, %v844
    %v1126 = vadd.f32 %v1124, 1e-05
    %v1127 = vadd.f32 %v1125, 1e-05
    %v1128 = vrsqrt.pop %v1126
    %v1129 = vrsqrt.pop %v1127
    %v1130 = vmul.f32 %v1114, %v1128
    %v1131 = vmul.f32 %v1115, %v1129
    %v1132 = vlaneseq
    %v1133 = vshrl.u32 %v1132, 7
    %v1134 = vsub.s32 6, %v1133
    %v1135 = vrot.slane %v40, %v1134
    %v1136 = vmul.f32 %v1130, %v1135
    %v1137 = vmul.f32 %v1131, %v1135
    %v1138 = vlaneseq
    %v1139 = vshrl.u32 %v1138, 7
    %v1140 = vsub.s32 7, %v1139
    %v1141 = vrot.slane %v40, %v1140
    %v1142 = vadd.f32 %v1136, %v1141
    %v1143 = vadd.f32 %v1137, %v1141
    %1144 = vst.msk [vmem:[#allocation3] sm:$0xff] %vm131, %v1142
    %1145 = vst.msk [vmem:[#allocation3 + $0x8] sm:$0xff] %vm131, %v1143
    // Predicated region
    $region42: #{tpu_custom_call.1} parent=1 // pred_check
      _
    $region43: #{tpu_custom_call.1} parent=1 // pred_check_branch
      %1147 = sbr.rel (0) target = $region45
    $region44: #{tpu_custom_call.1} parent=1 // pred_region
      %s1149 = ssub.s32 256, 256
      %1150 = vsyncadd [#allocation4], %s1149
      %s1151 = sshll.u32 [#allocation3], 4
      %s1152 = int_to_ptr.vmem [resolvable:$true] %s1151
      %1157 = dma.vmem_to_hbm [thread:$0]  %s1152, 256, %s10, [#allocation4], 128, 128, 8
    $region45: #{tpu_custom_call.1} parent=1 // pred_fallthru
      _
    // Predicated region
    $region46: #{tpu_custom_call.1} parent=1 // pred_check
      _
    $region47: #{tpu_custom_call.1} parent=1 // pred_check_branch
      %1159 = sbr.rel (0) target = $region49
    $region48: #{tpu_custom_call.1} parent=1 // pred_region
      %1160 = dma.done [#allocation4], 256
    $region49: #{tpu_custom_call.1} parent=1 // pred_fallthru
      _
    %1161 = vsyncpa [#allocation4], 1

</llo_original>
